<compile_context>
chip_gen: v5e
topology: v5e:2x2
jax: 0.10.0
libtpu: 0.0.40
codegen_flags: <defaults>
</compile_context>

<pallas_src>
import numpy as np
import jax
import jax.numpy as jnp
from jax import lax
from jax.experimental import pallas as pl
from jax.experimental.pallas import tpu as pltpu

GRID = 32                  # LeNet-5 spatial grid; all slab rows live on this grid
K = 5                      # conv kernel size
C1, C2, C3 = 6, 16, 120    # conv output channels
W1 = GRID - K + 1          # 28  conv1 output width
P1 = W1 // 2               # 14  pool1 output width
W2 = P1 - K + 1            # 10  conv2 output width
P2 = W2 // 2               # 5   pool2 output width
LA1 = W1 * C1              # 168 conv1 lanes  (lane = w*6 + c)
LP1 = P1 * C1              # 84  pool1 lanes
LA2 = W2 * C2              # 160 conv2 lanes  (lane = w*16 + c)
LP2 = P2 * C2              # 80  pool2 lanes
FEAT = 128                 # padded feature width for conv3 / fc1 / fc2


# ----------------------------------------------------------------------------
# The fused kernel.
# ----------------------------------------------------------------------------
def _lenet_kernel(x_ref, t1_ref, b1_ref, p1m_ref, t2_ref, b2_ref, p2m_ref,
                  w3_ref, b3_ref, f1w_ref, f1b_ref, f2w_ref, f2b_ref,
                  o_ref,
                  a1_ref, p1_ref, a2_ref, p2_ref, a3_ref):
    la1 = a1_ref.shape[0]          # B*32 - 4   (valid rows: h in [0, 28))
    lp1 = p1_ref.shape[0]          # la1 - 1    (valid rows: h = 2*h2, h2 < 14)
    la2 = a2_ref.shape[0]          # lp1 - 8    (valid rows: h = 2*h2, h2 < 10)
    lp2 = p2_ref.shape[0]          # la2 - 2    (valid rows: h = 4*h4, h4 < 5)
    batch = o_ref.shape[0]

    # ---- conv1 (1 -> 6, 5x5): 5 banded MXU matmuls; the j-taps and output channels are
    #      folded into the (32, 168) contraction; kernel-row taps are contiguous slices.
    acc = jnp.dot(x_ref[0:la1, :], t1_ref[0], preferred_element_type=jnp.float32)
    for i in range(1, K):                                        # statically unrolled
        acc = acc + jnp.dot(x_ref[i:i + la1, :], t1_ref[i],
                            preferred_element_type=jnp.float32)
    a1_ref[...] = jnp.maximum(acc + b1_ref[...], 0.0)            # one store, bias+ReLU fused

    # ---- avg-pool 2x2 #1: one row-shifted VPU add + one lane-compaction matmul
    #      (0.25 folded into p1m); result lives at stride-2 row positions.
    p1_ref[...] = jnp.dot(a1_ref[0:lp1, :] + a1_ref[1:lp1 + 1, :], p1m_ref[...],
                          preferred_element_type=jnp.float32)

    # ---- conv2 (6 -> 16, 5x5): 5 banded MXU matmuls, K = 84 (14 w-positions x 6 ch).
    acc = jnp.dot(p1_ref[0:la2, :], t2_ref[0], preferred_element_type=jnp.float32)
    for i in range(1, K):
        acc = acc + jnp.dot(p1_ref[2 * i:2 * i + la2, :], t2_ref[i],
                            preferred_element_type=jnp.float32)
    a2_ref[...] = jnp.maximum(acc + b2_ref[...], 0.0)

    # ---- avg-pool 2x2 #2; result lives at stride-4 row positions.
    p2_ref[...] = jnp.dot(a2_ref[0:lp2, :] + a2_ref[2:lp2 + 2, :], p2m_ref[...],
                          preferred_element_type=jnp.float32)

    # ---- conv3 (16 -> 120, 5x5 -> 1x1): per image, contract the 5 valid pool2 rows
    #      (80 lanes = 5 w-positions x 16 ch) against the (80, 128) per-row tap matrices.
    for b in range(batch):
        f = jnp.dot(p2_ref[b * GRID:b * GRID + 1, :], w3_ref[0],
                    preferred_element_type=jnp.float32)
        for i in range(1, K):
            r = b * GRID + 4 * i
            f = f + jnp.dot(p2_ref[r:r + 1, :], w3_ref[i],
                            preferred_element_type=jnp.float32)
        a3_ref[b:b + 1, :] = jnp.maximum(f + b3_ref[...], 0.0)

    # ---- fc1 + ReLU, fc2: lane-dense (batch, 128) matmuls; single lane-dense HBM store.
    hid = jnp.maximum(
        jnp.dot(a3_ref[...], f1w_ref[...], preferred_element_type=jnp.float32)
        + f1b_ref[...], 0.0)
    o_ref[...] = (jnp.dot(hid, f2w_ref[...], preferred_element_type=jnp.float32)
                  + f2b_ref[...])


# ----------------------------------------------------------------------------
# One-time parameter packing: banded conv matrices, pool-compaction matrices,
# padded fc weights (all host-side numpy, converted once).
# ----------------------------------------------------------------------------
def pack_params(params, num_classes):
    w1 = np.asarray(params["w1"], np.float32)     # (6, 1, 5, 5)
    b1 = np.asarray(params["b1"], np.float32)
    w2 = np.asarray(params["w2"], np.float32)     # (16, 6, 5, 5)
    b2 = np.asarray(params["b2"], np.float32)
    w3 = np.asarray(params["w3"], np.float32)     # (120, 16, 5, 5)
    b3 = np.asarray(params["b3"], np.float32)

    # conv1 banded matrices: t1[i][w + j, w*6 + co] = w1[co, 0, i, j]
    t1 = np.zeros((K, GRID, LA1), np.float32)
    for i in range(K):
        for w in range(W1):
            for j in range(K):
                t1[i, w + j, w * C1:(w + 1) * C1] = w1[:, 0, i, j]
    b1r = np.tile(b1, W1)[None, :]                               # (1, 168)

    # pool1 lane-compaction (168 -> 84), 0.25 folded in.
    p1m = np.zeros((LA1, LP1), np.float32)
    for w in range(P1):
        for dw in range(2):
            for c in range(C1):
                p1m[(2 * w + dw) * C1 + c, w * C1 + c] = 0.25

    # conv2 banded matrices: t2[i][(w + j)*6 + ci, w*16 + co] = w2[co, ci, i, j]
    t2 = np.zeros((K, LP1, LA2), np.float32)
    for i in range(K):
        for w in range(W2):
            for j in range(K):
                t2[i, (w + j) * C1:(w + j + 1) * C1,
                   w * C2:(w + 1) * C2] = w2[:, :, i, j].T
    b2r = np.tile(b2, W2)[None, :]                               # (1, 160)

    # pool2 lane-compaction (160 -> 80).
    p2m = np.zeros((LA2, LP2), np.float32)
    for w in range(P2):
        for dw in range(2):
            for c in range(C2):
                p2m[(2 * w + dw) * C2 + c, w * C2 + c] = 0.25

    # conv3 per-kernel-row tap matrices: w3t[i][j*16 + ci, co] = w3[co, ci, i, j]
    w3t = np.zeros((K, LP2, FEAT), np.float32)
    for i in range(K):
        for j in range(K):
            w3t[i, j * C2:(j + 1) * C2, :C3] = w3[:, :, i, j].T
    b3r = np.zeros((1, FEAT), np.float32)
    b3r[0, :C3] = b3

    f1w = np.zeros((FEAT, FEAT), np.float32)
    f1w[:C3, :84] = np.asarray(params["fc1_w"], np.float32).T
    f1b = np.zeros((1, FEAT), np.float32)
    f1b[0, :84] = np.asarray(params["fc1_b"], np.float32)
    f2w = np.zeros((FEAT, FEAT), np.float32)
    f2w[:84, :num_classes] = np.asarray(params["fc2_w"], np.float32).T
    f2b = np.zeros((1, FEAT), np.float32)
    f2b[0, :num_classes] = np.asarray(params["fc2_b"], np.float32)

    return tuple(jnp.asarray(a) for a in
                 (t1, b1r, p1m, t2, b2r, p2m, w3t, b3r, f1w, f1b, f2w, f2b))


# ----------------------------------------------------------------------------
# Wrapper: one pallas_call for the whole network.
# ----------------------------------------------------------------------------
@jax.jit
def lenet_forward(x_nchw, packed):
    batch, cin, h, w = x_nchw.shape
    assert (cin, h, w) == (1, GRID, GRID), x_nchw.shape
    rows = batch * GRID
    la1 = rows - (K - 1)           # conv1 slab rows
    lp1 = la1 - 1                  # pool1 slab rows
    la2 = lp1 - 2 * (K - 1)        # conv2 slab rows
    lp2 = la2 - 2                  # pool2 slab rows

    # Row-slab input: row = b*32 + h, lanes = w (W in lanes, per review).
    x_slab = x_nchw.astype(jnp.float32).reshape(rows, GRID)

    vmem = pl.BlockSpec(memory_space=pltpu.MemorySpace.VMEM)
    out = pl.pallas_call(
        _lenet_kernel,
        out_shape=jax.ShapeDtypeStruct((batch, FEAT), jnp.float32),
        in_specs=[vmem] * 13,
        out_specs=vmem,
        scratch_shapes=[
            pltpu.VMEM((la1, LA1), jnp.float32),     # conv1 slab (168 lanes)
            pltpu.VMEM((lp1, LP1), jnp.float32),     # pool1 slab (84 lanes)
            pltpu.VMEM((la2, LA2), jnp.float32),     # conv2 slab (160 lanes)
            pltpu.VMEM((lp2, LP2), jnp.float32),     # pool2 slab (80 lanes)
            pltpu.VMEM((batch, FEAT), jnp.float32),  # conv3/ReLU features
        ],
        compiler_params=pltpu.CompilerParams(vmem_limit_bytes=32 * 1024 * 1024),
    )(x_slab, *packed)
    return out    # (batch, 128); caller slices off the valid classes


# ----------------------------------------------------------------------------
# Pure-JAX reference (lax.conv) for correctness checking.
# ----------------------------------------------------------------------------
def ref_forward(x_nchw, params):
    dn = ("NCHW", "OIHW", "NCHW")

    def conv(x, w, b):
        y = lax.conv_general_dilated(x, w, (1, 1), "VALID", dimension_numbers=dn)
        return jnp.maximum(y + b[None, :, None, None], 0.0)

    def pool(x):
        bb, c, hh, ww = x.shape
        return x.reshape(bb, c, hh // 2, 2, ww // 2, 2).mean(axis=(3, 5))

    x = conv(x_nchw.astype(jnp.float32), params["w1"], params["b1"])
    x = pool(x)
    x = conv(x, params["w2"], params["b2"])
    x = pool(x)
    x = conv(x, params["w3"], params["b3"])
    x = x.reshape(x.shape[0], -1)
    x = jnp.maximum(x @ params["fc1_w"].T + params["fc1_b"], 0.0)
    x = x @ params["fc2_w"].T + params["fc2_b"]
    return x


# ----------------------------------------------------------------------------
# Deterministic synthetic parameters (shapes from the PyTorch module).
# ----------------------------------------------------------------------------
def init_params(key, num_classes):
    ks = jax.random.split(key, 10)

    def w(k, shape, fan_in):
        return (jax.random.normal(k, shape, jnp.float32) / jnp.sqrt(fan_in)).astype(jnp.float32)

    return {
        "w1": w(ks[0], (6, 1, 5, 5), 25),         "b1": w(ks[1], (6,), 25),
        "w2": w(ks[2], (16, 6, 5, 5), 150),       "b2": w(ks[3], (16,), 150),
        "w3": w(ks[4], (120, 16, 5, 5), 400),     "b3": w(ks[5], (120,), 400),
        "fc1_w": w(ks[6], (84, 120), 120),        "fc1_b": w(ks[7], (84,), 120),
        "fc2_w": w(ks[8], (num_classes, 84), 84), "fc2_b": w(ks[9], (num_classes,), 84),
    }


if __name__ == "__main__":
    num_classes = 10
    key = jax.random.PRNGKey(0)
    kx, kp = jax.random.split(key)

    # LeNet-5 requires 32x32 single-channel input (conv3 collapses 5x5 -> 1x1).
    x = jax.random.normal(kx, (2, 1, GRID, GRID), jnp.float32)    # NCHW, like torch
    params = init_params(kp, num_classes)
    packed = pack_params(params, num_classes)                     # pre-packed once

    out = jax.block_until_ready(lenet_forward(x, packed))[:, :num_classes]
    ref = jax.block_until_ready(ref_forward(x, params))

    assert out.shape == (2, num_classes), out.shape
    max_err = float(jnp.max(jnp.abs(out - ref)))
    assert bool(jnp.allclose(out, ref, rtol=1e-3, atol=1e-3)), max_err
    print("KERNEL_OK")
</pallas_src>

<mosaic_0001>
module attributes {stable_mosaic.version = 11 : i64} {
  func.func @_lenet_kernel(%arg0: memref<64x32xf32, #tpu.memory_space<vmem>>, %arg1: memref<5x32x168xf32, #tpu.memory_space<vmem>>, %arg2: memref<1x168xf32, #tpu.memory_space<vmem>>, %arg3: memref<168x84xf32, #tpu.memory_space<vmem>>, %arg4: memref<5x84x160xf32, #tpu.memory_space<vmem>>, %arg5: memref<1x160xf32, #tpu.memory_space<vmem>>, %arg6: memref<160x80xf32, #tpu.memory_space<vmem>>, %arg7: memref<5x80x128xf32, #tpu.memory_space<vmem>>, %arg8: memref<1x128xf32, #tpu.memory_space<vmem>>, %arg9: memref<128x128xf32, #tpu.memory_space<vmem>>, %arg10: memref<1x128xf32, #tpu.memory_space<vmem>>, %arg11: memref<128x128xf32, #tpu.memory_space<vmem>>, %arg12: memref<1x128xf32, #tpu.memory_space<vmem>>, %arg13: memref<2x128xf32, #tpu.memory_space<vmem>>, %arg14: memref<60x168xf32, #tpu.memory_space<vmem>>, %arg15: memref<59x84xf32, #tpu.memory_space<vmem>>, %arg16: memref<51x160xf32, #tpu.memory_space<vmem>>, %arg17: memref<49x80xf32, #tpu.memory_space<vmem>>, %arg18: memref<2x128xf32, #tpu.memory_space<vmem>>) attributes {dimension_semantics = [], scalar_prefetch = 0 : i64, scratch_operands = 5 : i64, tpu.core_type = #tpu.core_type<tc>} {
    %c0 = arith.constant 0 : index
    %c0_0 = arith.constant 0 : index
    %0 = vector.load %arg0[%c0, %c0_0] : memref<64x32xf32, #tpu.memory_space<vmem>>, vector<60x32xf32>
    %c0_1 = arith.constant 0 : index
    %c0_2 = arith.constant 0 : index
    %c0_3 = arith.constant 0 : index
    %1 = vector.load %arg1[%c0_1, %c0_2, %c0_3] : memref<5x32x168xf32, #tpu.memory_space<vmem>>, vector<1x32x168xf32>
    %2 = vector.shape_cast %1 : vector<1x32x168xf32> to vector<32x168xf32>
    %cst = arith.constant dense<0.000000e+00> : vector<60x168xf32>
    %3 = tpu.matmul %0, %2, %cst {dimension_numbers = #tpu.dot_dimension_numbers<[1], [0], [0], [1], [0, 0, 1, 1], [], []>} : vector<60x32xf32>, vector<32x168xf32>, vector<60x168xf32> -> vector<60x168xf32>
    %c1 = arith.constant 1 : index
    %c0_4 = arith.constant 0 : index
    %4 = vector.load %arg0[%c1, %c0_4] : memref<64x32xf32, #tpu.memory_space<vmem>>, vector<60x32xf32>
    %c1_5 = arith.constant 1 : index
    %c0_6 = arith.constant 0 : index
    %c0_7 = arith.constant 0 : index
    %5 = vector.load %arg1[%c1_5, %c0_6, %c0_7] : memref<5x32x168xf32, #tpu.memory_space<vmem>>, vector<1x32x168xf32>
    %6 = vector.shape_cast %5 : vector<1x32x168xf32> to vector<32x168xf32>
    %cst_8 = arith.constant dense<0.000000e+00> : vector<60x168xf32>
    %7 = tpu.matmul %4, %6, %cst_8 {dimension_numbers = #tpu.dot_dimension_numbers<[1], [0], [0], [1], [0, 0, 1, 1], [], []>} : vector<60x32xf32>, vector<32x168xf32>, vector<60x168xf32> -> vector<60x168xf32>
    %8 = arith.addf %3, %7 : vector<60x168xf32>
    %c2 = arith.constant 2 : index
    %c0_9 = arith.constant 0 : index
    %9 = vector.load %arg0[%c2, %c0_9] : memref<64x32xf32, #tpu.memory_space<vmem>>, vector<60x32xf32>
    %c2_10 = arith.constant 2 : index
    %c0_11 = arith.constant 0 : index
    %c0_12 = arith.constant 0 : index
    %10 = vector.load %arg1[%c2_10, %c0_11, %c0_12] : memref<5x32x168xf32, #tpu.memory_space<vmem>>, vector<1x32x168xf32>
    %11 = vector.shape_cast %10 : vector<1x32x168xf32> to vector<32x168xf32>
    %cst_13 = arith.constant dense<0.000000e+00> : vector<60x168xf32>
    %12 = tpu.matmul %9, %11, %cst_13 {dimension_numbers = #tpu.dot_dimension_numbers<[1], [0], [0], [1], [0, 0, 1, 1], [], []>} : vector<60x32xf32>, vector<32x168xf32>, vector<60x168xf32> -> vector<60x168xf32>
    %13 = arith.addf %8, %12 : vector<60x168xf32>
    %c3 = arith.constant 3 : index
    %c0_14 = arith.constant 0 : index
    %14 = vector.load %arg0[%c3, %c0_14] : memref<64x32xf32, #tpu.memory_space<vmem>>, vector<60x32xf32>
    %c3_15 = arith.constant 3 : index
    %c0_16 = arith.constant 0 : index
    %c0_17 = arith.constant 0 : index
    %15 = vector.load %arg1[%c3_15, %c0_16, %c0_17] : memref<5x32x168xf32, #tpu.memory_space<vmem>>, vector<1x32x168xf32>
    %16 = vector.shape_cast %15 : vector<1x32x168xf32> to vector<32x168xf32>
    %cst_18 = arith.constant dense<0.000000e+00> : vector<60x168xf32>
    %17 = tpu.matmul %14, %16, %cst_18 {dimension_numbers = #tpu.dot_dimension_numbers<[1], [0], [0], [1], [0, 0, 1, 1], [], []>} : vector<60x32xf32>, vector<32x168xf32>, vector<60x168xf32> -> vector<60x168xf32>
    %18 = arith.addf %13, %17 : vector<60x168xf32>
    %c4 = arith.constant 4 : index
    %c0_19 = arith.constant 0 : index
    %19 = vector.load %arg0[%c4, %c0_19] : memref<64x32xf32, #tpu.memory_space<vmem>>, vector<60x32xf32>
    %c4_20 = arith.constant 4 : index
    %c0_21 = arith.constant 0 : index
    %c0_22 = arith.constant 0 : index
    %20 = vector.load %arg1[%c4_20, %c0_21, %c0_22] : memref<5x32x168xf32, #tpu.memory_space<vmem>>, vector<1x32x168xf32>
    %21 = vector.shape_cast %20 : vector<1x32x168xf32> to vector<32x168xf32>
    %cst_23 = arith.constant dense<0.000000e+00> : vector<60x168xf32>
    %22 = tpu.matmul %19, %21, %cst_23 {dimension_numbers = #tpu.dot_dimension_numbers<[1], [0], [0], [1], [0, 0, 1, 1], [], []>} : vector<60x32xf32>, vector<32x168xf32>, vector<60x168xf32> -> vector<60x168xf32>
    %23 = arith.addf %18, %22 : vector<60x168xf32>
    %c0_24 = arith.constant 0 : index
    %c0_25 = arith.constant 0 : index
    %24 = vector.load %arg2[%c0_24, %c0_25] : memref<1x168xf32, #tpu.memory_space<vmem>>, vector<1x168xf32>
    %25 = vector.broadcast %24 : vector<1x168xf32> to vector<60x168xf32>
    %26 = arith.addf %23, %25 : vector<60x168xf32>
    %cst_26 = arith.constant 0.000000e+00 : f32
    %27 = vector.broadcast %cst_26 : f32 to vector<60x168xf32>
    %28 = arith.maximumf %26, %27 : vector<60x168xf32>
    %c0_27 = arith.constant 0 : index
    %c0_28 = arith.constant 0 : index
    %29 = vector.load %arg14[%c0_27, %c0_28] : memref<60x168xf32, #tpu.memory_space<vmem>>, vector<60x168xf32>
    tpu.vector_store %arg14[%c0_27, %c0_28], %28 {strides = array<i32>} : memref<60x168xf32, #tpu.memory_space<vmem>>, vector<60x168xf32>,
    %c0_29 = arith.constant 0 : index
    %c0_30 = arith.constant 0 : index
    %30 = vector.load %arg14[%c0_29, %c0_30] : memref<60x168xf32, #tpu.memory_space<vmem>>, vector<59x168xf32>
    %c1_31 = arith.constant 1 : index
    %c0_32 = arith.constant 0 : index
    %31 = vector.load %arg14[%c1_31, %c0_32] : memref<60x168xf32, #tpu.memory_space<vmem>>, vector<59x168xf32>
    %32 = arith.addf %30, %31 : vector<59x168xf32>
    %c0_33 = arith.constant 0 : index
    %c0_34 = arith.constant 0 : index
    %33 = vector.load %arg3[%c0_33, %c0_34] : memref<168x84xf32, #tpu.memory_space<vmem>>, vector<168x84xf32>
    %cst_35 = arith.constant dense<0.000000e+00> : vector<59x84xf32>
    %34 = tpu.matmul %32, %33, %cst_35 {dimension_numbers = #tpu.dot_dimension_numbers<[1], [0], [0], [1], [0, 0, 1, 1], [], []>} : vector<59x168xf32>, vector<168x84xf32>, vector<59x84xf32> -> vector<59x84xf32>
    %c0_36 = arith.constant 0 : index
    %c0_37 = arith.constant 0 : index
    %35 = vector.load %arg15[%c0_36, %c0_37] : memref<59x84xf32, #tpu.memory_space<vmem>>, vector<59x84xf32>
    tpu.vector_store %arg15[%c0_36, %c0_37], %34 {strides = array<i32>} : memref<59x84xf32, #tpu.memory_space<vmem>>, vector<59x84xf32>,
    %c0_38 = arith.constant 0 : index
    %c0_39 = arith.constant 0 : index
    %36 = vector.load %arg15[%c0_38, %c0_39] : memref<59x84xf32, #tpu.memory_space<vmem>>, vector<51x84xf32>
    %c0_40 = arith.constant 0 : index
    %c0_41 = arith.constant 0 : index
    %c0_42 = arith.constant 0 : index
    %37 = vector.load %arg4[%c0_40, %c0_41, %c0_42] : memref<5x84x160xf32, #tpu.memory_space<vmem>>, vector<1x84x160xf32>
    %38 = vector.shape_cast %37 : vector<1x84x160xf32> to vector<84x160xf32>
    %cst_43 = arith.constant dense<0.000000e+00> : vector<51x160xf32>
    %39 = tpu.matmul %36, %38, %cst_43 {dimension_numbers = #tpu.dot_dimension_numbers<[1], [0], [0], [1], [0, 0, 1, 1], [], []>} : vector<51x84xf32>, vector<84x160xf32>, vector<51x160xf32> -> vector<51x160xf32>
    %c2_44 = arith.constant 2 : index
    %c0_45 = arith.constant 0 : index
    %40 = vector.load %arg15[%c2_44, %c0_45] : memref<59x84xf32, #tpu.memory_space<vmem>>, vector<51x84xf32>
    %c1_46 = arith.constant 1 : index
    %c0_47 = arith.constant 0 : index
    %c0_48 = arith.constant 0 : index
    %41 = vector.load %arg4[%c1_46, %c0_47, %c0_48] : memref<5x84x160xf32, #tpu.memory_space<vmem>>, vector<1x84x160xf32>
    %42 = vector.shape_cast %41 : vector<1x84x160xf32> to vector<84x160xf32>
    %cst_49 = arith.constant dense<0.000000e+00> : vector<51x160xf32>
    %43 = tpu.matmul %40, %42, %cst_49 {dimension_numbers = #tpu.dot_dimension_numbers<[1], [0], [0], [1], [0, 0, 1, 1], [], []>} : vector<51x84xf32>, vector<84x160xf32>, vector<51x160xf32> -> vector<51x160xf32>
    %44 = arith.addf %39, %43 : vector<51x160xf32>
    %c4_50 = arith.constant 4 : index
    %c0_51 = arith.constant 0 : index
    %45 = vector.load %arg15[%c4_50, %c0_51] : memref<59x84xf32, #tpu.memory_space<vmem>>, vector<51x84xf32>
    %c2_52 = arith.constant 2 : index
    %c0_53 = arith.constant 0 : index
    %c0_54 = arith.constant 0 : index
    %46 = vector.load %arg4[%c2_52, %c0_53, %c0_54] : memref<5x84x160xf32, #tpu.memory_space<vmem>>, vector<1x84x160xf32>
    %47 = vector.shape_cast %46 : vector<1x84x160xf32> to vector<84x160xf32>
    %cst_55 = arith.constant dense<0.000000e+00> : vector<51x160xf32>
    %48 = tpu.matmul %45, %47, %cst_55 {dimension_numbers = #tpu.dot_dimension_numbers<[1], [0], [0], [1], [0, 0, 1, 1], [], []>} : vector<51x84xf32>, vector<84x160xf32>, vector<51x160xf32> -> vector<51x160xf32>
    %49 = arith.addf %44, %48 : vector<51x160xf32>
    %c6 = arith.constant 6 : index
    %c0_56 = arith.constant 0 : index
    %50 = vector.load %arg15[%c6, %c0_56] : memref<59x84xf32, #tpu.memory_space<vmem>>, vector<51x84xf32>
    %c3_57 = arith.constant 3 : index
    %c0_58 = arith.constant 0 : index
    %c0_59 = arith.constant 0 : index
    %51 = vector.load %arg4[%c3_57, %c0_58, %c0_59] : memref<5x84x160xf32, #tpu.memory_space<vmem>>, vector<1x84x160xf32>
    %52 = vector.shape_cast %51 : vector<1x84x160xf32> to vector<84x160xf32>
    %cst_60 = arith.constant dense<0.000000e+00> : vector<51x160xf32>
    %53 = tpu.matmul %50, %52, %cst_60 {dimension_numbers = #tpu.dot_dimension_numbers<[1], [0], [0], [1], [0, 0, 1, 1], [], []>} : vector<51x84xf32>, vector<84x160xf32>, vector<51x160xf32> -> vector<51x160xf32>
    %54 = arith.addf %49, %53 : vector<51x160xf32>
    %c8 = arith.constant 8 : index
    %c0_61 = arith.constant 0 : index
    %55 = vector.load %arg15[%c8, %c0_61] : memref<59x84xf32, #tpu.memory_space<vmem>>, vector<51x84xf32>
    %c4_62 = arith.constant 4 : index
    %c0_63 = arith.constant 0 : index
    %c0_64 = arith.constant 0 : index
    %56 = vector.load %arg4[%c4_62, %c0_63, %c0_64] : memref<5x84x160xf32, #tpu.memory_space<vmem>>, vector<1x84x160xf32>
    %57 = vector.shape_cast %56 : vector<1x84x160xf32> to vector<84x160xf32>
    %cst_65 = arith.constant dense<0.000000e+00> : vector<51x160xf32>
    %58 = tpu.matmul %55, %57, %cst_65 {dimension_numbers = #tpu.dot_dimension_numbers<[1], [0], [0], [1], [0, 0, 1, 1], [], []>} : vector<51x84xf32>, vector<84x160xf32>, vector<51x160xf32> -> vector<51x160xf32>
    %59 = arith.addf %54, %58 : vector<51x160xf32>
    %c0_66 = arith.constant 0 : index
    %c0_67 = arith.constant 0 : index
    %60 = vector.load %arg5[%c0_66, %c0_67] : memref<1x160xf32, #tpu.memory_space<vmem>>, vector<1x160xf32>
    %61 = vector.broadcast %60 : vector<1x160xf32> to vector<51x160xf32>
    %62 = arith.addf %59, %61 : vector<51x160xf32>
    %cst_68 = arith.constant 0.000000e+00 : f32
    %63 = vector.broadcast %cst_68 : f32 to vector<51x160xf32>
    %64 = arith.maximumf %62, %63 : vector<51x160xf32>
    %c0_69 = arith.constant 0 : index
    %c0_70 = arith.constant 0 : index
    %65 = vector.load %arg16[%c0_69, %c0_70] : memref<51x160xf32, #tpu.memory_space<vmem>>, vector<51x160xf32>
    tpu.vector_store %arg16[%c0_69, %c0_70], %64 {strides = array<i32>} : memref<51x160xf32, #tpu.memory_space<vmem>>, vector<51x160xf32>,
    %c0_71 = arith.constant 0 : index
    %c0_72 = arith.constant 0 : index
    %66 = vector.load %arg16[%c0_71, %c0_72] : memref<51x160xf32, #tpu.memory_space<vmem>>, vector<49x160xf32>
    %c2_73 = arith.constant 2 : index
    %c0_74 = arith.constant 0 : index
    %67 = vector.load %arg16[%c2_73, %c0_74] : memref<51x160xf32, #tpu.memory_space<vmem>>, vector<49x160xf32>
    %68 = arith.addf %66, %67 : vector<49x160xf32>
    %c0_75 = arith.constant 0 : index
    %c0_76 = arith.constant 0 : index
    %69 = vector.load %arg6[%c0_75, %c0_76] : memref<160x80xf32, #tpu.memory_space<vmem>>, vector<160x80xf32>
    %cst_77 = arith.constant dense<0.000000e+00> : vector<49x80xf32>
    %70 = tpu.matmul %68, %69, %cst_77 {dimension_numbers = #tpu.dot_dimension_numbers<[1], [0], [0], [1], [0, 0, 1, 1], [], []>} : vector<49x160xf32>, vector<160x80xf32>, vector<49x80xf32> -> vector<49x80xf32>
    %c0_78 = arith.constant 0 : index
    %c0_79 = arith.constant 0 : index
    %71 = vector.load %arg17[%c0_78, %c0_79] : memref<49x80xf32, #tpu.memory_space<vmem>>, vector<49x80xf32>
    tpu.vector_store %arg17[%c0_78, %c0_79], %70 {strides = array<i32>} : memref<49x80xf32, #tpu.memory_space<vmem>>, vector<49x80xf32>,
    %c0_80 = arith.constant 0 : index
    %c0_81 = arith.constant 0 : index
    %72 = vector.load %arg17[%c0_80, %c0_81] : memref<49x80xf32, #tpu.memory_space<vmem>>, vector<1x80xf32>
    %c0_82 = arith.constant 0 : index
    %c0_83 = arith.constant 0 : index
    %c0_84 = arith.constant 0 : index
    %73 = vector.load %arg7[%c0_82, %c0_83, %c0_84] : memref<5x80x128xf32, #tpu.memory_space<vmem>>, vector<1x80x128xf32>
    %74 = vector.shape_cast %73 : vector<1x80x128xf32> to vector<80x128xf32>
    %cst_85 = arith.constant dense<0.000000e+00> : vector<1x128xf32>
    %75 = tpu.matmul %72, %74, %cst_85 {dimension_numbers = #tpu.dot_dimension_numbers<[1], [0], [0], [1], [0, 0, 1, 1], [], []>} : vector<1x80xf32>, vector<80x128xf32>, vector<1x128xf32> -> vector<1x128xf32>
    %c4_86 = arith.constant 4 : index
    %c0_87 = arith.constant 0 : index
    %76 = vector.load %arg17[%c4_86, %c0_87] : memref<49x80xf32, #tpu.memory_space<vmem>>, vector<1x80xf32>
    %c1_88 = arith.constant 1 : index
    %c0_89 = arith.constant 0 : index
    %c0_90 = arith.constant 0 : index
    %77 = vector.load %arg7[%c1_88, %c0_89, %c0_90] : memref<5x80x128xf32, #tpu.memory_space<vmem>>, vector<1x80x128xf32>
    %78 = vector.shape_cast %77 : vector<1x80x128xf32> to vector<80x128xf32>
    %cst_91 = arith.constant dense<0.000000e+00> : vector<1x128xf32>
    %79 = tpu.matmul %76, %78, %cst_91 {dimension_numbers = #tpu.dot_dimension_numbers<[1], [0], [0], [1], [0, 0, 1, 1], [], []>} : vector<1x80xf32>, vector<80x128xf32>, vector<1x128xf32> -> vector<1x128xf32>
    %80 = arith.addf %75, %79 : vector<1x128xf32>
    %c8_92 = arith.constant 8 : index
    %c0_93 = arith.constant 0 : index
    %81 = vector.load %arg17[%c8_92, %c0_93] : memref<49x80xf32, #tpu.memory_space<vmem>>, vector<1x80xf32>
    %c2_94 = arith.constant 2 : index
    %c0_95 = arith.constant 0 : index
    %c0_96 = arith.constant 0 : index
    %82 = vector.load %arg7[%c2_94, %c0_95, %c0_96] : memref<5x80x128xf32, #tpu.memory_space<vmem>>, vector<1x80x128xf32>
    %83 = vector.shape_cast %82 : vector<1x80x128xf32> to vector<80x128xf32>
    %cst_97 = arith.constant dense<0.000000e+00> : vector<1x128xf32>
    %84 = tpu.matmul %81, %83, %cst_97 {dimension_numbers = #tpu.dot_dimension_numbers<[1], [0], [0], [1], [0, 0, 1, 1], [], []>} : vector<1x80xf32>, vector<80x128xf32>, vector<1x128xf32> -> vector<1x128xf32>
    %85 = arith.addf %80, %84 : vector<1x128xf32>
    %c12 = arith.constant 12 : index
    %c0_98 = arith.constant 0 : index
    %86 = vector.load %arg17[%c12, %c0_98] : memref<49x80xf32, #tpu.memory_space<vmem>>, vector<1x80xf32>
    %c3_99 = arith.constant 3 : index
    %c0_100 = arith.constant 0 : index
    %c0_101 = arith.constant 0 : index
    %87 = vector.load %arg7[%c3_99, %c0_100, %c0_101] : memref<5x80x128xf32, #tpu.memory_space<vmem>>, vector<1x80x128xf32>
    %88 = vector.shape_cast %87 : vector<1x80x128xf32> to vector<80x128xf32>
    %cst_102 = arith.constant dense<0.000000e+00> : vector<1x128xf32>
    %89 = tpu.matmul %86, %88, %cst_102 {dimension_numbers = #tpu.dot_dimension_numbers<[1], [0], [0], [1], [0, 0, 1, 1], [], []>} : vector<1x80xf32>, vector<80x128xf32>, vector<1x128xf32> -> vector<1x128xf32>
    %90 = arith.addf %85, %89 : vector<1x128xf32>
    %c16 = arith.constant 16 : index
    %c0_103 = arith.constant 0 : index
    %91 = vector.load %arg17[%c16, %c0_103] : memref<49x80xf32, #tpu.memory_space<vmem>>, vector<1x80xf32>
    %c4_104 = arith.constant 4 : index
    %c0_105 = arith.constant 0 : index
    %c0_106 = arith.constant 0 : index
    %92 = vector.load %arg7[%c4_104, %c0_105, %c0_106] : memref<5x80x128xf32, #tpu.memory_space<vmem>>, vector<1x80x128xf32>
    %93 = vector.shape_cast %92 : vector<1x80x128xf32> to vector<80x128xf32>
    %cst_107 = arith.constant dense<0.000000e+00> : vector<1x128xf32>
    %94 = tpu.matmul %91, %93, %cst_107 {dimension_numbers = #tpu.dot_dimension_numbers<[1], [0], [0], [1], [0, 0, 1, 1], [], []>} : vector<1x80xf32>, vector<80x128xf32>, vector<1x128xf32> -> vector<1x128xf32>
    %95 = arith.addf %90, %94 : vector<1x128xf32>
    %c0_108 = arith.constant 0 : index
    %c0_109 = arith.constant 0 : index
    %96 = vector.load %arg8[%c0_108, %c0_109] : memref<1x128xf32, #tpu.memory_space<vmem>>, vector<1x128xf32>
    %97 = arith.addf %95, %96 : vector<1x128xf32>
    %cst_110 = arith.constant 0.000000e+00 : f32
    %98 = vector.broadcast %cst_110 : f32 to vector<1x128xf32>
    %99 = arith.maximumf %97, %98 : vector<1x128xf32>
    %c0_111 = arith.constant 0 : index
    %c0_112 = arith.constant 0 : index
    %100 = vector.load %arg18[%c0_111, %c0_112] : memref<2x128xf32, #tpu.memory_space<vmem>>, vector<1x128xf32>
    tpu.vector_store %arg18[%c0_111, %c0_112], %99 {strides = array<i32>} : memref<2x128xf32, #tpu.memory_space<vmem>>, vector<1x128xf32>,
    %c32 = arith.constant 32 : index
    %c0_113 = arith.constant 0 : index
    %101 = vector.load %arg17[%c32, %c0_113] : memref<49x80xf32, #tpu.memory_space<vmem>>, vector<1x80xf32>
    %c0_114 = arith.constant 0 : index
    %c0_115 = arith.constant 0 : index
    %c0_116 = arith.constant 0 : index
    %102 = vector.load %arg7[%c0_114, %c0_115, %c0_116] : memref<5x80x128xf32, #tpu.memory_space<vmem>>, vector<1x80x128xf32>
    %103 = vector.shape_cast %102 : vector<1x80x128xf32> to vector<80x128xf32>
    %cst_117 = arith.constant dense<0.000000e+00> : vector<1x128xf32>
    %104 = tpu.matmul %101, %103, %cst_117 {dimension_numbers = #tpu.dot_dimension_numbers<[1], [0], [0], [1], [0, 0, 1, 1], [], []>} : vector<1x80xf32>, vector<80x128xf32>, vector<1x128xf32> -> vector<1x128xf32>
    %c36 = arith.constant 36 : index
    %c0_118 = arith.constant 0 : index
    %105 = vector.load %arg17[%c36, %c0_118] : memref<49x80xf32, #tpu.memory_space<vmem>>, vector<1x80xf32>
    %c1_119 = arith.constant 1 : index
    %c0_120 = arith.constant 0 : index
    %c0_121 = arith.constant 0 : index
    %106 = vector.load %arg7[%c1_119, %c0_120, %c0_121] : memref<5x80x128xf32, #tpu.memory_space<vmem>>, vector<1x80x128xf32>
    %107 = vector.shape_cast %106 : vector<1x80x128xf32> to vector<80x128xf32>
    %cst_122 = arith.constant dense<0.000000e+00> : vector<1x128xf32>
    %108 = tpu.matmul %105, %107, %cst_122 {dimension_numbers = #tpu.dot_dimension_numbers<[1], [0], [0], [1], [0, 0, 1, 1], [], []>} : vector<1x80xf32>, vector<80x128xf32>, vector<1x128xf32> -> vector<1x128xf32>
    %109 = arith.addf %104, %108 : vector<1x128xf32>
    %c40 = arith.constant 40 : index
    %c0_123 = arith.constant 0 : index
    %110 = vector.load %arg17[%c40, %c0_123] : memref<49x80xf32, #tpu.memory_space<vmem>>, vector<1x80xf32>
    %c2_124 = arith.constant 2 : index
    %c0_125 = arith.constant 0 : index
    %c0_126 = arith.constant 0 : index
    %111 = vector.load %arg7[%c2_124, %c0_125, %c0_126] : memref<5x80x128xf32, #tpu.memory_space<vmem>>, vector<1x80x128xf32>
    %112 = vector.shape_cast %111 : vector<1x80x128xf32> to vector<80x128xf32>
    %cst_127 = arith.constant dense<0.000000e+00> : vector<1x128xf32>
    %113 = tpu.matmul %110, %112, %cst_127 {dimension_numbers = #tpu.dot_dimension_numbers<[1], [0], [0], [1], [0, 0, 1, 1], [], []>} : vector<1x80xf32>, vector<80x128xf32>, vector<1x128xf32> -> vector<1x128xf32>
    %114 = arith.addf %109, %113 : vector<1x128xf32>
    %c44 = arith.constant 44 : index
    %c0_128 = arith.constant 0 : index
    %115 = vector.load %arg17[%c44, %c0_128] : memref<49x80xf32, #tpu.memory_space<vmem>>, vector<1x80xf32>
    %c3_129 = arith.constant 3 : index
    %c0_130 = arith.constant 0 : index
    %c0_131 = arith.constant 0 : index
    %116 = vector.load %arg7[%c3_129, %c0_130, %c0_131] : memref<5x80x128xf32, #tpu.memory_space<vmem>>, vector<1x80x128xf32>
    %117 = vector.shape_cast %116 : vector<1x80x128xf32> to vector<80x128xf32>
    %cst_132 = arith.constant dense<0.000000e+00> : vector<1x128xf32>
    %118 = tpu.matmul %115, %117, %cst_132 {dimension_numbers = #tpu.dot_dimension_numbers<[1], [0], [0], [1], [0, 0, 1, 1], [], []>} : vector<1x80xf32>, vector<80x128xf32>, vector<1x128xf32> -> vector<1x128xf32>
    %119 = arith.addf %114, %118 : vector<1x128xf32>
    %c48 = arith.constant 48 : index
    %c0_133 = arith.constant 0 : index
    %120 = vector.load %arg17[%c48, %c0_133] : memref<49x80xf32, #tpu.memory_space<vmem>>, vector<1x80xf32>
    %c4_134 = arith.constant 4 : index
    %c0_135 = arith.constant 0 : index
    %c0_136 = arith.constant 0 : index
    %121 = vector.load %arg7[%c4_134, %c0_135, %c0_136] : memref<5x80x128xf32, #tpu.memory_space<vmem>>, vector<1x80x128xf32>
    %122 = vector.shape_cast %121 : vector<1x80x128xf32> to vector<80x128xf32>
    %cst_137 = arith.constant dense<0.000000e+00> : vector<1x128xf32>
    %123 = tpu.matmul %120, %122, %cst_137 {dimension_numbers = #tpu.dot_dimension_numbers<[1], [0], [0], [1], [0, 0, 1, 1], [], []>} : vector<1x80xf32>, vector<80x128xf32>, vector<1x128xf32> -> vector<1x128xf32>
    %124 = arith.addf %119, %123 : vector<1x128xf32>
    %c0_138 = arith.constant 0 : index
    %c0_139 = arith.constant 0 : index
    %125 = vector.load %arg8[%c0_138, %c0_139] : memref<1x128xf32, #tpu.memory_space<vmem>>, vector<1x128xf32>
    %126 = arith.addf %124, %125 : vector<1x128xf32>
    %cst_140 = arith.constant 0.000000e+00 : f32
    %127 = vector.broadcast %cst_140 : f32 to vector<1x128xf32>
    %128 = arith.maximumf %126, %127 : vector<1x128xf32>
    %c1_141 = arith.constant 1 : index
    %c0_142 = arith.constant 0 : index
    %129 = vector.load %arg18[%c1_141, %c0_142] : memref<2x128xf32, #tpu.memory_space<vmem>>, vector<1x128xf32>
    tpu.vector_store %arg18[%c1_141, %c0_142], %128 {strides = array<i32>} : memref<2x128xf32, #tpu.memory_space<vmem>>, vector<1x128xf32>,
    %c0_143 = arith.constant 0 : index
    %c0_144 = arith.constant 0 : index
    %130 = vector.load %arg18[%c0_143, %c0_144] : memref<2x128xf32, #tpu.memory_space<vmem>>, vector<2x128xf32>
    %c0_145 = arith.constant 0 : index
    %c0_146 = arith.constant 0 : index
    %131 = vector.load %arg9[%c0_145, %c0_146] : memref<128x128xf32, #tpu.memory_space<vmem>>, vector<128x128xf32>
    %cst_147 = arith.constant dense<0.000000e+00> : vector<2x128xf32>
    %132 = tpu.matmul %130, %131, %cst_147 {dimension_numbers = #tpu.dot_dimension_numbers<[1], [0], [0], [1], [0, 0, 1, 1], [], []>} : vector<2x128xf32>, vector<128x128xf32>, vector<2x128xf32> -> vector<2x128xf32>
    %c0_148 = arith.constant 0 : index
    %c0_149 = arith.constant 0 : index
    %133 = vector.load %arg10[%c0_148, %c0_149] : memref<1x128xf32, #tpu.memory_space<vmem>>, vector<1x128xf32>
    %134 = vector.broadcast %133 : vector<1x128xf32> to vector<2x128xf32>
    %135 = arith.addf %132, %134 : vector<2x128xf32>
    %cst_150 = arith.constant 0.000000e+00 : f32
    %136 = vector.broadcast %cst_150 : f32 to vector<2x128xf32>
    %137 = arith.maximumf %135, %136 : vector<2x128xf32>
    %c0_151 = arith.constant 0 : index
    %c0_152 = arith.constant 0 : index
    %138 = vector.load %arg11[%c0_151, %c0_152] : memref<128x128xf32, #tpu.memory_space<vmem>>, vector<128x128xf32>
    %cst_153 = arith.constant dense<0.000000e+00> : vector<2x128xf32>
    %139 = tpu.matmul %137, %138, %cst_153 {dimension_numbers = #tpu.dot_dimension_numbers<[1], [0], [0], [1], [0, 0, 1, 1], [], []>} : vector<2x128xf32>, vector<128x128xf32>, vector<2x128xf32> -> vector<2x128xf32>
    %c0_154 = arith.constant 0 : index
    %c0_155 = arith.constant 0 : index
    %140 = vector.load %arg12[%c0_154, %c0_155] : memref<1x128xf32, #tpu.memory_space<vmem>>, vector<1x128xf32>
    %141 = vector.broadcast %140 : vector<1x128xf32> to vector<2x128xf32>
    %142 = arith.addf %139, %141 : vector<2x128xf32>
    %c0_156 = arith.constant 0 : index
    %c0_157 = arith.constant 0 : index
    %143 = vector.load %arg13[%c0_156, %c0_157] : memref<2x128xf32, #tpu.memory_space<vmem>>, vector<2x128xf32>
    tpu.vector_store %arg13[%c0_156, %c0_157], %142 {strides = array<i32>} : memref<2x128xf32, #tpu.memory_space<vmem>>, vector<2x128xf32>,
    return
  }
}

</mosaic_0001>

<llo_original>
// kernel: lenet_forward.1
$region0: #{lenet_forward.1}
  #allocation0 [shape = 'u32[]', space=smem, size = 0x4, offset = 0x4, fixed_abs, tag = 'smem constant byte address 0x4 - core index']
  #allocation1 [shape = 'u32[72,128]{1,0:T(1,128)}', space=vmem, size = 0x9000, scoped, tag = 'internal scratch']
  #allocation2 [shape = 'f32[60,168]{1,0:T(8,128)}', space=vmem, size = 0x10000, scoped, tag = 'scratch operand']
  #allocation3 [shape = 'f32[59,84]{1,0:T(8,128)}', space=vmem, size = 0x8000, scoped, tag = 'scratch operand']
  #allocation4 [shape = 'f32[51,160]{1,0:T(8,128)}', space=vmem, size = 0xe000, scoped, tag = 'scratch operand']
  #allocation5 [shape = 'f32[49,80]{1,0:T(8,128)}', space=vmem, size = 0x7000, scoped, tag = 'scratch operand']
  #allocation6 [shape = 'f32[2,128]{1,0:T(2,128)}', space=vmem, size = 0x400, scoped, tag = 'scratch operand']
  %s0 = inlined_call_operand.vmem [shape: f32[64,32], index: 0, kind: input, shape index: {}]
  %s1 = inlined_call_operand.vmem [shape: f32[5,32,168], index: 1, kind: input, shape index: {}]
  %s2 = inlined_call_operand.vmem [shape: f32[1,168], index: 2, kind: input, shape index: {}]
  %s3 = inlined_call_operand.vmem [shape: f32[168,84], index: 3, kind: input, shape index: {}]
  %s4 = inlined_call_operand.vmem [shape: f32[5,84,160], index: 4, kind: input, shape index: {}]
  %s5 = inlined_call_operand.vmem [shape: f32[1,160], index: 5, kind: input, shape index: {}]
  %s6 = inlined_call_operand.vmem [shape: f32[160,80], index: 6, kind: input, shape index: {}]
  %s7 = inlined_call_operand.vmem [shape: f32[5,80,128], index: 7, kind: input, shape index: {}]
  %s8 = inlined_call_operand.vmem [shape: f32[1,128], index: 8, kind: input, shape index: {}]
  %s9 = inlined_call_operand.vmem [shape: f32[128,128], index: 9, kind: input, shape index: {}]
  %s10 = inlined_call_operand.vmem [shape: f32[1,128], index: 10, kind: input, shape index: {}]
  %s11 = inlined_call_operand.vmem [shape: f32[128,128], index: 11, kind: input, shape index: {}]
  %s12 = inlined_call_operand.vmem [shape: f32[1,128], index: 12, kind: input, shape index: {}]
  %s13 = inlined_call_operand.hbm [shape: f32[2,128], index: 13, kind: output, shape index: {}]
  %s14 = sld [smem:[#allocation0]]
  $region62: #{lenet_forward.1} parent=0
    _
  %s16 = ssub.s32 1, %s14
  %s17 = scalar_select 0, %s16, %s14
  $region1: #{lenet_forward.1} parent=0
    #allocation7 [shape = 'u8[1024]{0}', space=vmem, size = 0x400, scoped, tag = 'output window, operand 0, single buffered']
    #allocation8 [shape = 's32[1]{0}', space=sflag, size = 0x4, scoped, tag = 'scoped memory for lenet_forward.1']
    %18 = vsyncpa [#allocation8], 0
    // Predicated region
    $region2: #{lenet_forward.1} parent=1 // pred_check
      _
    $region3: #{lenet_forward.1} parent=1 // pred_check_branch
      %20 = sbr.rel (0) target = $region5
    $region4: #{lenet_forward.1} parent=1 // pred_region
      _
    $region5: #{lenet_forward.1} parent=1 // pred_fallthru
      _
    // Predicated region
    $region6: #{lenet_forward.1} parent=1 // pred_check
      _
    $region7: #{lenet_forward.1} parent=1 // pred_check_branch
      %22 = sbr.rel (0) target = $region9
    $region8: #{lenet_forward.1} parent=1 // pred_region
      _
    $region9: #{lenet_forward.1} parent=1 // pred_fallthru
      _
    // Predicated region
    $region10: #{lenet_forward.1} parent=1 // pred_check
      _
    $region11: #{lenet_forward.1} parent=1 // pred_check_branch
      %24 = sbr.rel (0) target = $region13
    $region12: #{lenet_forward.1} parent=1 // pred_region
      _
    $region13: #{lenet_forward.1} parent=1 // pred_fallthru
      _
    // Predicated region
    $region14: #{lenet_forward.1} parent=1 // pred_check
      _
    $region15: #{lenet_forward.1} parent=1 // pred_check_branch
      %26 = sbr.rel (0) target = $region17
    $region16: #{lenet_forward.1} parent=1 // pred_region
      _
    $region17: #{lenet_forward.1} parent=1 // pred_fallthru
      _
    // Predicated region
    $region18: #{lenet_forward.1} parent=1 // pred_check
      _
    $region19: #{lenet_forward.1} parent=1 // pred_check_branch
      %28 = sbr.rel (0) target = $region21
    $region20: #{lenet_forward.1} parent=1 // pred_region
      _
    $region21: #{lenet_forward.1} parent=1 // pred_fallthru
      _
    // Predicated region
    $region22: #{lenet_forward.1} parent=1 // pred_check
      _
    $region23: #{lenet_forward.1} parent=1 // pred_check_branch
      %30 = sbr.rel (0) target = $region25
    $region24: #{lenet_forward.1} parent=1 // pred_region
      _
    $region25: #{lenet_forward.1} parent=1 // pred_fallthru
      _
    // Predicated region
    $region26: #{lenet_forward.1} parent=1 // pred_check
      _
    $region27: #{lenet_forward.1} parent=1 // pred_check_branch
      %32 = sbr.rel (0) target = $region29
    $region28: #{lenet_forward.1} parent=1 // pred_region
      _
    $region29: #{lenet_forward.1} parent=1 // pred_fallthru
      _
    // Predicated region
    $region30: #{lenet_forward.1} parent=1 // pred_check
      _
    $region31: #{lenet_forward.1} parent=1 // pred_check_branch
      %34 = sbr.rel (0) target = $region33
    $region32: #{lenet_forward.1} parent=1 // pred_region
      _
    $region33: #{lenet_forward.1} parent=1 // pred_fallthru
      _
    // Predicated region
    $region34: #{lenet_forward.1} parent=1 // pred_check
      _
    $region35: #{lenet_forward.1} parent=1 // pred_check_branch
      %36 = sbr.rel (0) target = $region37
    $region36: #{lenet_forward.1} parent=1 // pred_region
      _
    $region37: #{lenet_forward.1} parent=1 // pred_fallthru
      _
    // Predicated region
    $region38: #{lenet_forward.1} parent=1 // pred_check
      _
    $region39: #{lenet_forward.1} parent=1 // pred_check_branch
      %38 = sbr.rel (0) target = $region41
    $region40: #{lenet_forward.1} parent=1 // pred_region
      _
    $region41: #{lenet_forward.1} parent=1 // pred_fallthru
      _
    // Predicated region
    $region42: #{lenet_forward.1} parent=1 // pred_check
      _
    $region43: #{lenet_forward.1} parent=1 // pred_check_branch
      %40 = sbr.rel (0) target = $region45
    $region44: #{lenet_forward.1} parent=1 // pred_region
      _
    $region45: #{lenet_forward.1} parent=1 // pred_fallthru
      _
    // Predicated region
    $region46: #{lenet_forward.1} parent=1 // pred_check
      _
    $region47: #{lenet_forward.1} parent=1 // pred_check_branch
      %42 = sbr.rel (0) target = $region49
    $region48: #{lenet_forward.1} parent=1 // pred_region
      _
    $region49: #{lenet_forward.1} parent=1 // pred_fallthru
      _
    // Predicated region
    $region50: #{lenet_forward.1} parent=1 // pred_check
      _
    $region51: #{lenet_forward.1} parent=1 // pred_check_branch
      %44 = sbr.rel (0) target = $region53
    $region52: #{lenet_forward.1} parent=1 // pred_region
      _
    $region53: #{lenet_forward.1} parent=1 // pred_fallthru
      _
    %v45 = vld [vmem:[%s0] sm:$0xff]
    %v46 = vld [vmem:[%s0 + $0x8] sm:$0xff]
    %v47 = vld [vmem:[%s0 + $0x10] sm:$0xff]
    %v48 = vld [vmem:[%s0 + $0x18] sm:$0xff]
    %v49 = vld [vmem:[%s0 + $0x20] sm:$0xff]
    %v50 = vld [vmem:[%s0 + $0x28] sm:$0xff]
    %v51 = vld [vmem:[%s0 + $0x30] sm:$0xff]
    %v52 = vld [vmem:[%s0 + $0x38] sm:$0xf]
    %v53 = vld [vmem:[%s1] sm:$0xff]
    %v54 = vld [vmem:[%s1 + $0x8] sm:$0xff]
    %v55 = vld [vmem:[%s1 + $0x10] sm:$0xff]
    %v56 = vld [vmem:[%s1 + $0x18] sm:$0xff]
    %v57 = vld [vmem:[%s1 + $0x20] sm:$0xff]
    %v58 = vld [vmem:[%s1 + $0x28] sm:$0xff]
    %v59 = vld [vmem:[%s1 + $0x30] sm:$0xff]
    %v60 = vld [vmem:[%s1 + $0x38] sm:$0xff]
    %v61 = vld [vmem:[%s0 + $0x1] sm:$0xff]
    %v62 = vld [vmem:[%s0 + $0x9] sm:$0xff]
    %v63 = vld [vmem:[%s0 + $0x11] sm:$0xff]
    %v64 = vld [vmem:[%s0 + $0x19] sm:$0xff]
    %v65 = vld [vmem:[%s0 + $0x21] sm:$0xff]
    %v66 = vld [vmem:[%s0 + $0x29] sm:$0xff]
    %v67 = vld [vmem:[%s0 + $0x31] sm:$0xff]
    %v68 = vld [vmem:[%s0 + $0x39] sm:$0xf]
    %s69 = scalar_lea.vmem %s1, 64
    %v70 = vld [vmem:[%s69] sm:$0xff]
    %v71 = vld [vmem:[%s69 + $0x8] sm:$0xff]
    %v72 = vld [vmem:[%s69 + $0x10] sm:$0xff]
    %v73 = vld [vmem:[%s69 + $0x18] sm:$0xff]
    %v74 = vld [vmem:[%s69 + $0x20] sm:$0xff]
    %v75 = vld [vmem:[%s69 + $0x28] sm:$0xff]
    %v76 = vld [vmem:[%s69 + $0x30] sm:$0xff]
    %v77 = vld [vmem:[%s69 + $0x38] sm:$0xff]
    %vm78 = vcmask 261120
    %v80 = vsel %vm78, %v61, 0
    %v83 = vsel %vm78, %v62, 0
    %v86 = vsel %vm78, %v63, 0
    %v89 = vsel %vm78, %v64, 0
    %v92 = vsel %vm78, %v65, 0
    %v95 = vsel %vm78, %v66, 0
    %v98 = vsel %vm78, %v67, 0
    %v101 = vsel %vm78, %v68, 0
    %103 = vmatpush.msra.mxu0 0.0
    %104 = vmatpush.msra.mxu0 0.0
    %105 = vmatpush.msra.mxu0 0.0
    %106 = vmatpush.msra.mxu0 0.0
    %107 = vmatpush.msra.mxu0 0.0
    %108 = vmatpush.msra.mxu0 0.0
    %109 = vmatpush.msra.mxu0 0.0
    %110 = vmatpush.msra.mxu0 0.0
    %111 = vmatpush.msra.mxu0 0.0
    %112 = vmatpush.msra.mxu0 0.0
    %113 = vmatpush.msra.mxu0 0.0
    %114 = vmatpush.msra.mxu0 0.0
    %115 = vmatpush.msra.mxu0 %v76
    %116 = vmatpush.msra.mxu0 %v74
    %117 = vmatpush.msra.mxu0 %v72
    %118 = vmatpush.msra.mxu0 %v70
    %119 = vmatmul.f32.gmra.mxu0 %v80
    %v120 = vpop.f32.mrf.mxu0
    %v121 = vadd.f32 0.0, %v120
    %122 = vmatmul.f32.gmra.mxu0 %v83
    %v123 = vpop.f32.mrf.mxu0
    %v124 = vadd.f32 0.0, %v123
    %125 = vmatmul.f32.gmra.mxu0 %v86
    %v126 = vpop.f32.mrf.mxu0
    %v127 = vadd.f32 0.0, %v126
    %128 = vmatmul.f32.gmra.mxu0 %v89
    %v129 = vpop.f32.mrf.mxu0
    %v130 = vadd.f32 0.0, %v129
    %131 = vmatmul.f32.gmra.mxu0 %v92
    %v132 = vpop.f32.mrf.mxu0
    %v133 = vadd.f32 0.0, %v132
    %134 = vmatmul.f32.gmra.mxu0 %v95
    %v135 = vpop.f32.mrf.mxu0
    %v136 = vadd.f32 0.0, %v135
    %137 = vmatmul.f32.gmra.mxu0 %v98
    %v138 = vpop.f32.mrf.mxu0
    %v139 = vadd.f32 0.0, %v138
    %140 = vmatmul.f32.gmra.mxu0 %v101
    %v141 = vpop.f32.mrf.mxu0
    %v142 = vadd.f32 0.0, %v141
    %143 = vdwg.mxu0
    %144 = vmatpush.msra.mxu0 0.0
    %145 = vmatpush.msra.mxu0 0.0
    %146 = vmatpush.msra.mxu0 0.0
    %147 = vmatpush.msra.mxu0 0.0
    %148 = vmatpush.msra.mxu0 0.0
    %149 = vmatpush.msra.mxu0 0.0
    %150 = vmatpush.msra.mxu0 0.0
    %151 = vmatpush.msra.mxu0 0.0
    %152 = vmatpush.msra.mxu0 0.0
    %153 = vmatpush.msra.mxu0 0.0
    %154 = vmatpush.msra.mxu0 0.0
    %155 = vmatpush.msra.mxu0 0.0
    %156 = vmatpush.msra.mxu0 %v77
    %157 = vmatpush.msra.mxu0 %v75
    %158 = vmatpush.msra.mxu0 %v73
    %159 = vmatpush.msra.mxu0 %v71
    %160 = vmatmul.f32.gmra.mxu0 %v80
    %v161 = vpop.f32.mrf.mxu0
    %v162 = vadd.f32 0.0, %v161
    %163 = vmatmul.f32.gmra.mxu0 %v83
    %v164 = vpop.f32.mrf.mxu0
    %v165 = vadd.f32 0.0, %v164
    %166 = vmatmul.f32.gmra.mxu0 %v86
    %v167 = vpop.f32.mrf.mxu0
    %v168 = vadd.f32 0.0, %v167
    %169 = vmatmul.f32.gmra.mxu0 %v89
    %v170 = vpop.f32.mrf.mxu0
    %v171 = vadd.f32 0.0, %v170
    %172 = vmatmul.f32.gmra.mxu0 %v92
    %v173 = vpop.f32.mrf.mxu0
    %v174 = vadd.f32 0.0, %v173
    %175 = vmatmul.f32.gmra.mxu0 %v95
    %v176 = vpop.f32.mrf.mxu0
    %v177 = vadd.f32 0.0, %v176
    %178 = vmatmul.f32.gmra.mxu0 %v98
    %v179 = vpop.f32.mrf.mxu0
    %v180 = vadd.f32 0.0, %v179
    %181 = vmatmul.f32.gmra.mxu0 %v101
    %v182 = vpop.f32.mrf.mxu0
    %v183 = vadd.f32 0.0, %v182
    %184 = vdwg.mxu0
    %v186 = vsel %vm78, %v45, 0
    %v189 = vsel %vm78, %v46, 0
    %v192 = vsel %vm78, %v47, 0
    %v195 = vsel %vm78, %v48, 0
    %v198 = vsel %vm78, %v49, 0
    %v201 = vsel %vm78, %v50, 0
    %v204 = vsel %vm78, %v51, 0
    %v207 = vsel %vm78, %v52, 0
    %209 = vmatpush.msra.mxu0 0.0
    %210 = vmatpush.msra.mxu0 0.0
    %211 = vmatpush.msra.mxu0 0.0
    %212 = vmatpush.msra.mxu0 0.0
    %213 = vmatpush.msra.mxu0 0.0
    %214 = vmatpush.msra.mxu0 0.0
    %215 = vmatpush.msra.mxu0 0.0
    %216 = vmatpush.msra.mxu0 0.0
    %217 = vmatpush.msra.mxu0 0.0
    %218 = vmatpush.msra.mxu0 0.0
    %219 = vmatpush.msra.mxu0 0.0
    %220 = vmatpush.msra.mxu0 0.0
    %221 = vmatpush.msra.mxu0 %v59
    %222 = vmatpush.msra.mxu0 %v57
    %223 = vmatpush.msra.mxu0 %v55
    %224 = vmatpush.msra.mxu0 %v53
    %225 = vmatmul.f32.gmra.mxu0 %v186
    %v226 = vpop.f32.mrf.mxu0
    %v227 = vadd.f32 %v121, %v226
    %228 = vmatmul.f32.gmra.mxu0 %v189
    %v229 = vpop.f32.mrf.mxu0
    %v230 = vadd.f32 %v124, %v229
    %231 = vmatmul.f32.gmra.mxu0 %v192
    %v232 = vpop.f32.mrf.mxu0
    %v233 = vadd.f32 %v127, %v232
    %234 = vmatmul.f32.gmra.mxu0 %v195
    %v235 = vpop.f32.mrf.mxu0
    %v236 = vadd.f32 %v130, %v235
    %237 = vmatmul.f32.gmra.mxu0 %v198
    %v238 = vpop.f32.mrf.mxu0
    %v239 = vadd.f32 %v133, %v238
    %240 = vmatmul.f32.gmra.mxu0 %v201
    %v241 = vpop.f32.mrf.mxu0
    %v242 = vadd.f32 %v136, %v241
    %243 = vmatmul.f32.gmra.mxu0 %v204
    %v244 = vpop.f32.mrf.mxu0
    %v245 = vadd.f32 %v139, %v244
    %246 = vmatmul.f32.gmra.mxu0 %v207
    %v247 = vpop.f32.mrf.mxu0
    %v248 = vadd.f32 %v142, %v247
    %249 = vdwg.mxu0
    %250 = vmatpush.msra.mxu0 0.0
    %251 = vmatpush.msra.mxu0 0.0
    %252 = vmatpush.msra.mxu0 0.0
    %253 = vmatpush.msra.mxu0 0.0
    %254 = vmatpush.msra.mxu0 0.0
    %255 = vmatpush.msra.mxu0 0.0
    %256 = vmatpush.msra.mxu0 0.0
    %257 = vmatpush.msra.mxu0 0.0
    %258 = vmatpush.msra.mxu0 0.0
    %259 = vmatpush.msra.mxu0 0.0
    %260 = vmatpush.msra.mxu0 0.0
    %261 = vmatpush.msra.mxu0 0.0
    %262 = vmatpush.msra.mxu0 %v60
    %263 = vmatpush.msra.mxu0 %v58
    %264 = vmatpush.msra.mxu0 %v56
    %265 = vmatpush.msra.mxu0 %v54
    %266 = vmatmul.f32.gmra.mxu0 %v186
    %v267 = vpop.f32.mrf.mxu0
    %v268 = vadd.f32 %v162, %v267
    %269 = vmatmul.f32.gmra.mxu0 %v189
    %v270 = vpop.f32.mrf.mxu0
    %v271 = vadd.f32 %v165, %v270
    %272 = vmatmul.f32.gmra.mxu0 %v192
    %v273 = vpop.f32.mrf.mxu0
    %v274 = vadd.f32 %v168, %v273
    %275 = vmatmul.f32.gmra.mxu0 %v195
    %v276 = vpop.f32.mrf.mxu0
    %v277 = vadd.f32 %v171, %v276
    %278 = vmatmul.f32.gmra.mxu0 %v198
    %v279 = vpop.f32.mrf.mxu0
    %v280 = vadd.f32 %v174, %v279
    %281 = vmatmul.f32.gmra.mxu0 %v201
    %v282 = vpop.f32.mrf.mxu0
    %v283 = vadd.f32 %v177, %v282
    %284 = vmatmul.f32.gmra.mxu0 %v204
    %v285 = vpop.f32.mrf.mxu0
    %v286 = vadd.f32 %v180, %v285
    %287 = vmatmul.f32.gmra.mxu0 %v207
    %v288 = vpop.f32.mrf.mxu0
    %v289 = vadd.f32 %v183, %v288
    %290 = vdwg.mxu0
    %v291 = vld [vmem:[%s0 + $0x2] sm:$0xff]
    %v292 = vld [vmem:[%s0 + $0xa] sm:$0xff]
    %v293 = vld [vmem:[%s0 + $0x12] sm:$0xff]
    %v294 = vld [vmem:[%s0 + $0x1a] sm:$0xff]
    %v295 = vld [vmem:[%s0 + $0x22] sm:$0xff]
    %v296 = vld [vmem:[%s0 + $0x2a] sm:$0xff]
    %v297 = vld [vmem:[%s0 + $0x32] sm:$0xff]
    %v298 = vld [vmem:[%s0 + $0x3a] sm:$0xf]
    %s299 = scalar_lea.vmem %s1, 128
    %v300 = vld [vmem:[%s299] sm:$0xff]
    %v301 = vld [vmem:[%s299 + $0x8] sm:$0xff]
    %v302 = vld [vmem:[%s299 + $0x10] sm:$0xff]
    %v303 = vld [vmem:[%s299 + $0x18] sm:$0xff]
    %v304 = vld [vmem:[%s299 + $0x20] sm:$0xff]
    %v305 = vld [vmem:[%s299 + $0x28] sm:$0xff]
    %v306 = vld [vmem:[%s299 + $0x30] sm:$0xff]
    %v307 = vld [vmem:[%s299 + $0x38] sm:$0xff]
    %v309 = vsel %vm78, %v291, 0
    %v312 = vsel %vm78, %v292, 0
    %v315 = vsel %vm78, %v293, 0
    %v318 = vsel %vm78, %v294, 0
    %v321 = vsel %vm78, %v295, 0
    %v324 = vsel %vm78, %v296, 0
    %v327 = vsel %vm78, %v297, 0
    %v330 = vsel %vm78, %v298, 0
    %332 = vmatpush.msra.mxu0 0.0
    %333 = vmatpush.msra.mxu0 0.0
    %334 = vmatpush.msra.mxu0 0.0
    %335 = vmatpush.msra.mxu0 0.0
    %336 = vmatpush.msra.mxu0 0.0
    %337 = vmatpush.msra.mxu0 0.0
    %338 = vmatpush.msra.mxu0 0.0
    %339 = vmatpush.msra.mxu0 0.0
    %340 = vmatpush.msra.mxu0 0.0
    %341 = vmatpush.msra.mxu0 0.0
    %342 = vmatpush.msra.mxu0 0.0
    %343 = vmatpush.msra.mxu0 0.0
    %344 = vmatpush.msra.mxu0 %v306
    %345 = vmatpush.msra.mxu0 %v304
    %346 = vmatpush.msra.mxu0 %v302
    %347 = vmatpush.msra.mxu0 %v300
    %348 = vmatmul.f32.gmra.mxu0 %v309
    %v349 = vpop.f32.mrf.mxu0
    %v350 = vadd.f32 0.0, %v349
    %351 = vmatmul.f32.gmra.mxu0 %v312
    %v352 = vpop.f32.mrf.mxu0
    %v353 = vadd.f32 0.0, %v352
    %354 = vmatmul.f32.gmra.mxu0 %v315
    %v355 = vpop.f32.mrf.mxu0
    %v356 = vadd.f32 0.0, %v355
    %357 = vmatmul.f32.gmra.mxu0 %v318
    %v358 = vpop.f32.mrf.mxu0
    %v359 = vadd.f32 0.0, %v358
    %360 = vmatmul.f32.gmra.mxu0 %v321
    %v361 = vpop.f32.mrf.mxu0
    %v362 = vadd.f32 0.0, %v361
    %363 = vmatmul.f32.gmra.mxu0 %v324
    %v364 = vpop.f32.mrf.mxu0
    %v365 = vadd.f32 0.0, %v364
    %366 = vmatmul.f32.gmra.mxu0 %v327
    %v367 = vpop.f32.mrf.mxu0
    %v368 = vadd.f32 0.0, %v367
    %369 = vmatmul.f32.gmra.mxu0 %v330
    %v370 = vpop.f32.mrf.mxu0
    %v371 = vadd.f32 0.0, %v370
    %372 = vdwg.mxu0
    %373 = vmatpush.msra.mxu0 0.0
    %374 = vmatpush.msra.mxu0 0.0
    %375 = vmatpush.msra.mxu0 0.0
    %376 = vmatpush.msra.mxu0 0.0
    %377 = vmatpush.msra.mxu0 0.0
    %378 = vmatpush.msra.mxu0 0.0
    %379 = vmatpush.msra.mxu0 0.0
    %380 = vmatpush.msra.mxu0 0.0
    %381 = vmatpush.msra.mxu0 0.0
    %382 = vmatpush.msra.mxu0 0.0
    %383 = vmatpush.msra.mxu0 0.0
    %384 = vmatpush.msra.mxu0 0.0
    %385 = vmatpush.msra.mxu0 %v307
    %386 = vmatpush.msra.mxu0 %v305
    %387 = vmatpush.msra.mxu0 %v303
    %388 = vmatpush.msra.mxu0 %v301
    %389 = vmatmul.f32.gmra.mxu0 %v309
    %v390 = vpop.f32.mrf.mxu0
    %v391 = vadd.f32 0.0, %v390
    %392 = vmatmul.f32.gmra.mxu0 %v312
    %v393 = vpop.f32.mrf.mxu0
    %v394 = vadd.f32 0.0, %v393
    %395 = vmatmul.f32.gmra.mxu0 %v315
    %v396 = vpop.f32.mrf.mxu0
    %v397 = vadd.f32 0.0, %v396
    %398 = vmatmul.f32.gmra.mxu0 %v318
    %v399 = vpop.f32.mrf.mxu0
    %v400 = vadd.f32 0.0, %v399
    %401 = vmatmul.f32.gmra.mxu0 %v321
    %v402 = vpop.f32.mrf.mxu0
    %v403 = vadd.f32 0.0, %v402
    %404 = vmatmul.f32.gmra.mxu0 %v324
    %v405 = vpop.f32.mrf.mxu0
    %v406 = vadd.f32 0.0, %v405
    %407 = vmatmul.f32.gmra.mxu0 %v327
    %v408 = vpop.f32.mrf.mxu0
    %v409 = vadd.f32 0.0, %v408
    %410 = vmatmul.f32.gmra.mxu0 %v330
    %v411 = vpop.f32.mrf.mxu0
    %v412 = vadd.f32 0.0, %v411
    %413 = vdwg.mxu0
    %v414 = vadd.f32 %v227, %v350
    %v415 = vadd.f32 %v268, %v391
    %v416 = vadd.f32 %v230, %v353
    %v417 = vadd.f32 %v271, %v394
    %v418 = vadd.f32 %v233, %v356
    %v419 = vadd.f32 %v274, %v397
    %v420 = vadd.f32 %v236, %v359
    %v421 = vadd.f32 %v277, %v400
    %v422 = vadd.f32 %v239, %v362
    %v423 = vadd.f32 %v280, %v403
    %v424 = vadd.f32 %v242, %v365
    %v425 = vadd.f32 %v283, %v406
    %v426 = vadd.f32 %v245, %v368
    %v427 = vadd.f32 %v286, %v409
    %v428 = vadd.f32 %v248, %v371
    %v429 = vadd.f32 %v289, %v412
    %v430 = vld [vmem:[%s0 + $0x3] sm:$0xff]
    %v431 = vld [vmem:[%s0 + $0xb] sm:$0xff]
    %v432 = vld [vmem:[%s0 + $0x13] sm:$0xff]
    %v433 = vld [vmem:[%s0 + $0x1b] sm:$0xff]
    %v434 = vld [vmem:[%s0 + $0x23] sm:$0xff]
    %v435 = vld [vmem:[%s0 + $0x2b] sm:$0xff]
    %v436 = vld [vmem:[%s0 + $0x33] sm:$0xff]
    %v437 = vld [vmem:[%s0 + $0x3b] sm:$0xf]
    %s438 = scalar_lea.vmem %s1, 192
    %v439 = vld [vmem:[%s438] sm:$0xff]
    %v440 = vld [vmem:[%s438 + $0x8] sm:$0xff]
    %v441 = vld [vmem:[%s438 + $0x10] sm:$0xff]
    %v442 = vld [vmem:[%s438 + $0x18] sm:$0xff]
    %v443 = vld [vmem:[%s438 + $0x20] sm:$0xff]
    %v444 = vld [vmem:[%s438 + $0x28] sm:$0xff]
    %v445 = vld [vmem:[%s438 + $0x30] sm:$0xff]
    %v446 = vld [vmem:[%s438 + $0x38] sm:$0xff]
    %v448 = vsel %vm78, %v430, 0
    %v451 = vsel %vm78, %v431, 0
    %v454 = vsel %vm78, %v432, 0
    %v457 = vsel %vm78, %v433, 0
    %v460 = vsel %vm78, %v434, 0
    %v463 = vsel %vm78, %v435, 0
    %v466 = vsel %vm78, %v436, 0
    %v469 = vsel %vm78, %v437, 0
    %471 = vmatpush.msra.mxu0 0.0
    %472 = vmatpush.msra.mxu0 0.0
    %473 = vmatpush.msra.mxu0 0.0
    %474 = vmatpush.msra.mxu0 0.0
    %475 = vmatpush.msra.mxu0 0.0
    %476 = vmatpush.msra.mxu0 0.0
    %477 = vmatpush.msra.mxu0 0.0
    %478 = vmatpush.msra.mxu0 0.0
    %479 = vmatpush.msra.mxu0 0.0
    %480 = vmatpush.msra.mxu0 0.0
    %481 = vmatpush.msra.mxu0 0.0
    %482 = vmatpush.msra.mxu0 0.0
    %483 = vmatpush.msra.mxu0 %v445
    %484 = vmatpush.msra.mxu0 %v443
    %485 = vmatpush.msra.mxu0 %v441
    %486 = vmatpush.msra.mxu0 %v439
    %487 = vmatmul.f32.gmra.mxu0 %v448
    %v488 = vpop.f32.mrf.mxu0
    %v489 = vadd.f32 0.0, %v488
    %490 = vmatmul.f32.gmra.mxu0 %v451
    %v491 = vpop.f32.mrf.mxu0
    %v492 = vadd.f32 0.0, %v491
    %493 = vmatmul.f32.gmra.mxu0 %v454
    %v494 = vpop.f32.mrf.mxu0
    %v495 = vadd.f32 0.0, %v494
    %496 = vmatmul.f32.gmra.mxu0 %v457
    %v497 = vpop.f32.mrf.mxu0
    %v498 = vadd.f32 0.0, %v497
    %499 = vmatmul.f32.gmra.mxu0 %v460
    %v500 = vpop.f32.mrf.mxu0
    %v501 = vadd.f32 0.0, %v500
    %502 = vmatmul.f32.gmra.mxu0 %v463
    %v503 = vpop.f32.mrf.mxu0
    %v504 = vadd.f32 0.0, %v503
    %505 = vmatmul.f32.gmra.mxu0 %v466
    %v506 = vpop.f32.mrf.mxu0
    %v507 = vadd.f32 0.0, %v506
    %508 = vmatmul.f32.gmra.mxu0 %v469
    %v509 = vpop.f32.mrf.mxu0
    %v510 = vadd.f32 0.0, %v509
    %511 = vdwg.mxu0
    %512 = vmatpush.msra.mxu0 0.0
    %513 = vmatpush.msra.mxu0 0.0
    %514 = vmatpush.msra.mxu0 0.0
    %515 = vmatpush.msra.mxu0 0.0
    %516 = vmatpush.msra.mxu0 0.0
    %517 = vmatpush.msra.mxu0 0.0
    %518 = vmatpush.msra.mxu0 0.0
    %519 = vmatpush.msra.mxu0 0.0
    %520 = vmatpush.msra.mxu0 0.0
    %521 = vmatpush.msra.mxu0 0.0
    %522 = vmatpush.msra.mxu0 0.0
    %523 = vmatpush.msra.mxu0 0.0
    %524 = vmatpush.msra.mxu0 %v446
    %525 = vmatpush.msra.mxu0 %v444
    %526 = vmatpush.msra.mxu0 %v442
    %527 = vmatpush.msra.mxu0 %v440
    %528 = vmatmul.f32.gmra.mxu0 %v448
    %v529 = vpop.f32.mrf.mxu0
    %v530 = vadd.f32 0.0, %v529
    %531 = vmatmul.f32.gmra.mxu0 %v451
    %v532 = vpop.f32.mrf.mxu0
    %v533 = vadd.f32 0.0, %v532
    %534 = vmatmul.f32.gmra.mxu0 %v454
    %v535 = vpop.f32.mrf.mxu0
    %v536 = vadd.f32 0.0, %v535
    %537 = vmatmul.f32.gmra.mxu0 %v457
    %v538 = vpop.f32.mrf.mxu0
    %v539 = vadd.f32 0.0, %v538
    %540 = vmatmul.f32.gmra.mxu0 %v460
    %v541 = vpop.f32.mrf.mxu0
    %v542 = vadd.f32 0.0, %v541
    %543 = vmatmul.f32.gmra.mxu0 %v463
    %v544 = vpop.f32.mrf.mxu0
    %v545 = vadd.f32 0.0, %v544
    %546 = vmatmul.f32.gmra.mxu0 %v466
    %v547 = vpop.f32.mrf.mxu0
    %v548 = vadd.f32 0.0, %v547
    %549 = vmatmul.f32.gmra.mxu0 %v469
    %v550 = vpop.f32.mrf.mxu0
    %v551 = vadd.f32 0.0, %v550
    %552 = vdwg.mxu0
    %v553 = vadd.f32 %v414, %v489
    %v554 = vadd.f32 %v415, %v530
    %v555 = vadd.f32 %v416, %v492
    %v556 = vadd.f32 %v417, %v533
    %v557 = vadd.f32 %v418, %v495
    %v558 = vadd.f32 %v419, %v536
    %v559 = vadd.f32 %v420, %v498
    %v560 = vadd.f32 %v421, %v539
    %v561 = vadd.f32 %v422, %v501
    %v562 = vadd.f32 %v423, %v542
    %v563 = vadd.f32 %v424, %v504
    %v564 = vadd.f32 %v425, %v545
    %v565 = vadd.f32 %v426, %v507
    %v566 = vadd.f32 %v427, %v548
    %v567 = vadd.f32 %v428, %v510
    %v568 = vadd.f32 %v429, %v551
    %v569 = vld [vmem:[%s0 + $0x4] sm:$0xff]
    %v570 = vld [vmem:[%s0 + $0xc] sm:$0xff]
    %v571 = vld [vmem:[%s0 + $0x14] sm:$0xff]
    %v572 = vld [vmem:[%s0 + $0x1c] sm:$0xff]
    %v573 = vld [vmem:[%s0 + $0x24] sm:$0xff]
    %v574 = vld [vmem:[%s0 + $0x2c] sm:$0xff]
    %v575 = vld [vmem:[%s0 + $0x34] sm:$0xff]
    %v576 = vld [vmem:[%s0 + $0x3c] sm:$0xf]
    %s577 = scalar_lea.vmem %s1, 256
    %v578 = vld [vmem:[%s577] sm:$0xff]
    %v579 = vld [vmem:[%s577 + $0x8] sm:$0xff]
    %v580 = vld [vmem:[%s577 + $0x10] sm:$0xff]
    %v581 = vld [vmem:[%s577 + $0x18] sm:$0xff]
    %v582 = vld [vmem:[%s577 + $0x20] sm:$0xff]
    %v583 = vld [vmem:[%s577 + $0x28] sm:$0xff]
    %v584 = vld [vmem:[%s577 + $0x30] sm:$0xff]
    %v585 = vld [vmem:[%s577 + $0x38] sm:$0xff]
    %v587 = vsel %vm78, %v569, 0
    %v590 = vsel %vm78, %v570, 0
    %v593 = vsel %vm78, %v571, 0
    %v596 = vsel %vm78, %v572, 0
    %v599 = vsel %vm78, %v573, 0
    %v602 = vsel %vm78, %v574, 0
    %v605 = vsel %vm78, %v575, 0
    %v608 = vsel %vm78, %v576, 0
    %610 = vmatpush.msra.mxu0 0.0
    %611 = vmatpush.msra.mxu0 0.0
    %612 = vmatpush.msra.mxu0 0.0
    %613 = vmatpush.msra.mxu0 0.0
    %614 = vmatpush.msra.mxu0 0.0
    %615 = vmatpush.msra.mxu0 0.0
    %616 = vmatpush.msra.mxu0 0.0
    %617 = vmatpush.msra.mxu0 0.0
    %618 = vmatpush.msra.mxu0 0.0
    %619 = vmatpush.msra.mxu0 0.0
    %620 = vmatpush.msra.mxu0 0.0
    %621 = vmatpush.msra.mxu0 0.0
    %622 = vmatpush.msra.mxu0 %v584
    %623 = vmatpush.msra.mxu0 %v582
    %624 = vmatpush.msra.mxu0 %v580
    %625 = vmatpush.msra.mxu0 %v578
    %626 = vmatmul.f32.gmra.mxu0 %v587
    %v627 = vpop.f32.mrf.mxu0
    %v628 = vadd.f32 0.0, %v627
    %629 = vmatmul.f32.gmra.mxu0 %v590
    %v630 = vpop.f32.mrf.mxu0
    %v631 = vadd.f32 0.0, %v630
    %632 = vmatmul.f32.gmra.mxu0 %v593
    %v633 = vpop.f32.mrf.mxu0
    %v634 = vadd.f32 0.0, %v633
    %635 = vmatmul.f32.gmra.mxu0 %v596
    %v636 = vpop.f32.mrf.mxu0
    %v637 = vadd.f32 0.0, %v636
    %638 = vmatmul.f32.gmra.mxu0 %v599
    %v639 = vpop.f32.mrf.mxu0
    %v640 = vadd.f32 0.0, %v639
    %641 = vmatmul.f32.gmra.mxu0 %v602
    %v642 = vpop.f32.mrf.mxu0
    %v643 = vadd.f32 0.0, %v642
    %644 = vmatmul.f32.gmra.mxu0 %v605
    %v645 = vpop.f32.mrf.mxu0
    %v646 = vadd.f32 0.0, %v645
    %647 = vmatmul.f32.gmra.mxu0 %v608
    %v648 = vpop.f32.mrf.mxu0
    %v649 = vadd.f32 0.0, %v648
    %650 = vdwg.mxu0
    %651 = vmatpush.msra.mxu0 0.0
    %652 = vmatpush.msra.mxu0 0.0
    %653 = vmatpush.msra.mxu0 0.0
    %654 = vmatpush.msra.mxu0 0.0
    %655 = vmatpush.msra.mxu0 0.0
    %656 = vmatpush.msra.mxu0 0.0
    %657 = vmatpush.msra.mxu0 0.0
    %658 = vmatpush.msra.mxu0 0.0
    %659 = vmatpush.msra.mxu0 0.0
    %660 = vmatpush.msra.mxu0 0.0
    %661 = vmatpush.msra.mxu0 0.0
    %662 = vmatpush.msra.mxu0 0.0
    %663 = vmatpush.msra.mxu0 %v585
    %664 = vmatpush.msra.mxu0 %v583
    %665 = vmatpush.msra.mxu0 %v581
    %666 = vmatpush.msra.mxu0 %v579
    %667 = vmatmul.f32.gmra.mxu0 %v587
    %v668 = vpop.f32.mrf.mxu0
    %v669 = vadd.f32 0.0, %v668
    %670 = vmatmul.f32.gmra.mxu0 %v590
    %v671 = vpop.f32.mrf.mxu0
    %v672 = vadd.f32 0.0, %v671
    %673 = vmatmul.f32.gmra.mxu0 %v593
    %v674 = vpop.f32.mrf.mxu0
    %v675 = vadd.f32 0.0, %v674
    %676 = vmatmul.f32.gmra.mxu0 %v596
    %v677 = vpop.f32.mrf.mxu0
    %v678 = vadd.f32 0.0, %v677
    %679 = vmatmul.f32.gmra.mxu0 %v599
    %v680 = vpop.f32.mrf.mxu0
    %v681 = vadd.f32 0.0, %v680
    %682 = vmatmul.f32.gmra.mxu0 %v602
    %v683 = vpop.f32.mrf.mxu0
    %v684 = vadd.f32 0.0, %v683
    %685 = vmatmul.f32.gmra.mxu0 %v605
    %v686 = vpop.f32.mrf.mxu0
    %v687 = vadd.f32 0.0, %v686
    %688 = vmatmul.f32.gmra.mxu0 %v608
    %v689 = vpop.f32.mrf.mxu0
    %v690 = vadd.f32 0.0, %v689
    %691 = vdwg.mxu0
    %v692 = vadd.f32 %v553, %v628
    %v693 = vadd.f32 %v554, %v669
    %v694 = vadd.f32 %v555, %v631
    %v695 = vadd.f32 %v556, %v672
    %v696 = vadd.f32 %v557, %v634
    %v697 = vadd.f32 %v558, %v675
    %v698 = vadd.f32 %v559, %v637
    %v699 = vadd.f32 %v560, %v678
    %v700 = vadd.f32 %v561, %v640
    %v701 = vadd.f32 %v562, %v681
    %v702 = vadd.f32 %v563, %v643
    %v703 = vadd.f32 %v564, %v684
    %v704 = vadd.f32 %v565, %v646
    %v705 = vadd.f32 %v566, %v687
    %v706 = vadd.f32 %v567, %v649
    %v707 = vadd.f32 %v568, %v690
    %v708 = vld [vmem:[%s2] sm:$0x3]
    %v710 = vperm.slane %v708, 0
    %v711 = vperm.slane %v708, 1
    %v714 = vadd.f32 %v692, %v710
    %v715 = vadd.f32 %v693, %v711
    %v716 = vadd.f32 %v694, %v710
    %v717 = vadd.f32 %v695, %v711
    %v718 = vadd.f32 %v696, %v710
    %v719 = vadd.f32 %v697, %v711
    %v720 = vadd.f32 %v698, %v710
    %v721 = vadd.f32 %v699, %v711
    %v722 = vadd.f32 %v700, %v710
    %v723 = vadd.f32 %v701, %v711
    %v724 = vadd.f32 %v702, %v710
    %v725 = vadd.f32 %v703, %v711
    %v726 = vadd.f32 %v704, %v710
    %v727 = vadd.f32 %v705, %v711
    %v728 = vadd.f32 %v706, %v710
    %v729 = vadd.f32 %v707, %v711
    %v730 = vmax.f32 %v714, 0.0
    %v731 = vmax.f32 %v715, 0.0
    %v732 = vmax.f32 %v716, 0.0
    %v733 = vmax.f32 %v717, 0.0
    %v734 = vmax.f32 %v718, 0.0
    %v735 = vmax.f32 %v719, 0.0
    %v736 = vmax.f32 %v720, 0.0
    %v737 = vmax.f32 %v721, 0.0
    %v738 = vmax.f32 %v722, 0.0
    %v739 = vmax.f32 %v723, 0.0
    %v740 = vmax.f32 %v724, 0.0
    %v741 = vmax.f32 %v725, 0.0
    %v742 = vmax.f32 %v726, 0.0
    %v743 = vmax.f32 %v727, 0.0
    %v744 = vmax.f32 %v728, 0.0
    %v745 = vmax.f32 %v729, 0.0
    %746 = vst [vmem:[#allocation2] sm:$0xff] %v730
    %vm747 = vcmask 326656
    %748 = vst.msk [vmem:[#allocation2 + $0x8] sm:$0xff] %vm747, %v731
    %749 = vst [vmem:[#allocation2 + $0x10] sm:$0xff] %v732
    %750 = vst.msk [vmem:[#allocation2 + $0x18] sm:$0xff] %vm747, %v733
    %751 = vst [vmem:[#allocation2 + $0x20] sm:$0xff] %v734
    %752 = vst.msk [vmem:[#allocation2 + $0x28] sm:$0xff] %vm747, %v735
    %753 = vst [vmem:[#allocation2 + $0x30] sm:$0xff] %v736
    %754 = vst.msk [vmem:[#allocation2 + $0x38] sm:$0xff] %vm747, %v737
    %755 = vst [vmem:[#allocation2 + $0x40] sm:$0xff] %v738
    %756 = vst.msk [vmem:[#allocation2 + $0x48] sm:$0xff] %vm747, %v739
    %757 = vst [vmem:[#allocation2 + $0x50] sm:$0xff] %v740
    %758 = vst.msk [vmem:[#allocation2 + $0x58] sm:$0xff] %vm747, %v741
    %759 = vst [vmem:[#allocation2 + $0x60] sm:$0xff] %v742
    %760 = vst.msk [vmem:[#allocation2 + $0x68] sm:$0xff] %vm747, %v743
    %761 = vst [vmem:[#allocation2 + $0x70] sm:$0xf] %v744
    %vm762 = vcmask 322560
    %763 = vst.msk [vmem:[#allocation2 + $0x78] sm:$0xf] %vm762, %v745
    %v764 = vld [vmem:[#allocation2] sm:$0xff]
    %v765 = vld [vmem:[#allocation2 + $0x8] sm:$0xff]
    %v766 = vld [vmem:[#allocation2 + $0x10] sm:$0xff]
    %v767 = vld [vmem:[#allocation2 + $0x18] sm:$0xff]
    %v768 = vld [vmem:[#allocation2 + $0x20] sm:$0xff]
    %v769 = vld [vmem:[#allocation2 + $0x28] sm:$0xff]
    %v770 = vld [vmem:[#allocation2 + $0x30] sm:$0xff]
    %v771 = vld [vmem:[#allocation2 + $0x38] sm:$0xff]
    %v772 = vld [vmem:[#allocation2 + $0x40] sm:$0xff]
    %v773 = vld [vmem:[#allocation2 + $0x48] sm:$0xff]
    %v774 = vld [vmem:[#allocation2 + $0x50] sm:$0xff]
    %v775 = vld [vmem:[#allocation2 + $0x58] sm:$0xff]
    %v776 = vld [vmem:[#allocation2 + $0x60] sm:$0xff]
    %v777 = vld [vmem:[#allocation2 + $0x68] sm:$0xff]
    %v778 = vld [vmem:[#allocation2 + $0x70] sm:$0x7]
    %v779 = vld [vmem:[#allocation2 + $0x78] sm:$0x7]
    %v780 = vld [vmem:[#allocation2] sm:$0xfe]
    %v781 = vld [vmem:[#allocation2 + $0x8] sm:$0xfe]
    %v782 = vld [vmem:[#allocation2 + $0x70] sm:$0xf]
    %v783 = vld [vmem:[#allocation2 + $0x78] sm:$0xf]
    %vm800 = vcmask 1046528
    %v801 = vrot.slane %v780, 1
    %v802 = vrot.slane %v766, 1
    %v803 = vsel %vm800, %v801, %v802
    %v804 = vrot.slane %v781, 1
    %v805 = vrot.slane %v767, 1
    %v806 = vsel %vm800, %v804, %v805
    %v807 = vrot.slane %v768, 1
    %v808 = vsel %vm800, %v802, %v807
    %v809 = vrot.slane %v769, 1
    %v810 = vsel %vm800, %v805, %v809
    %v811 = vrot.slane %v770, 1
    %v812 = vsel %vm800, %v807, %v811
    %v813 = vrot.slane %v771, 1
    %v814 = vsel %vm800, %v809, %v813
    %v815 = vrot.slane %v772, 1
    %v816 = vsel %vm800, %v811, %v815
    %v817 = vrot.slane %v773, 1
    %v818 = vsel %vm800, %v813, %v817
    %v819 = vrot.slane %v774, 1
    %v820 = vsel %vm800, %v815, %v819
    %v821 = vrot.slane %v775, 1
    %v822 = vsel %vm800, %v817, %v821
    %v823 = vrot.slane %v776, 1
    %v824 = vsel %vm800, %v819, %v823
    %v825 = vrot.slane %v777, 1
    %v826 = vsel %vm800, %v821, %v825
    %v827 = vrot.slane %v782, 1
    %v828 = vsel %vm800, %v823, %v827
    %v829 = vrot.slane %v783, 1
    %v830 = vsel %vm800, %v825, %v829
    %v847 = vadd.f32 %v764, %v803
    %v848 = vadd.f32 %v765, %v806
    %v849 = vadd.f32 %v766, %v808
    %v850 = vadd.f32 %v767, %v810
    %v851 = vadd.f32 %v768, %v812
    %v852 = vadd.f32 %v769, %v814
    %v853 = vadd.f32 %v770, %v816
    %v854 = vadd.f32 %v771, %v818
    %v855 = vadd.f32 %v772, %v820
    %v856 = vadd.f32 %v773, %v822
    %v857 = vadd.f32 %v774, %v824
    %v858 = vadd.f32 %v775, %v826
    %v859 = vadd.f32 %v776, %v828
    %v860 = vadd.f32 %v777, %v830
    %v861 = vadd.f32 %v778, %v827
    %v862 = vadd.f32 %v779, %v829
    %v863 = vld [vmem:[%s3] sm:$0xff]
    %v864 = vld [vmem:[%s3 + $0x8] sm:$0xff]
    %v865 = vld [vmem:[%s3 + $0x10] sm:$0xff]
    %v866 = vld [vmem:[%s3 + $0x18] sm:$0xff]
    %v867 = vld [vmem:[%s3 + $0x20] sm:$0xff]
    %v868 = vld [vmem:[%s3 + $0x28] sm:$0xff]
    %v869 = vld [vmem:[%s3 + $0x30] sm:$0xff]
    %v870 = vld [vmem:[%s3 + $0x38] sm:$0xff]
    %v871 = vld [vmem:[%s3 + $0x40] sm:$0xff]
    %v872 = vld [vmem:[%s3 + $0x48] sm:$0xff]
    %v873 = vld [vmem:[%s3 + $0x50] sm:$0xff]
    %v874 = vld [vmem:[%s3 + $0x58] sm:$0xff]
    %v875 = vld [vmem:[%s3 + $0x60] sm:$0xff]
    %v876 = vld [vmem:[%s3 + $0x68] sm:$0xff]
    %v877 = vld [vmem:[%s3 + $0x70] sm:$0xff]
    %v878 = vld [vmem:[%s3 + $0x78] sm:$0xff]
    %v879 = vld [vmem:[%s3 + $0x80] sm:$0xff]
    %v880 = vld [vmem:[%s3 + $0x88] sm:$0xff]
    %v881 = vld [vmem:[%s3 + $0x90] sm:$0xff]
    %v882 = vld [vmem:[%s3 + $0x98] sm:$0xff]
    %v883 = vld [vmem:[%s3 + $0xa0] sm:$0xff]
    %v885 = vsel %vm747, %v848, 0
    %v888 = vsel %vm747, %v850, 0
    %v891 = vsel %vm747, %v852, 0
    %v894 = vsel %vm747, %v854, 0
    %v897 = vsel %vm747, %v856, 0
    %v900 = vsel %vm747, %v858, 0
    %v903 = vsel %vm747, %v860, 0
    %v906 = vsel %vm747, %v862, 0
    %908 = vmatpush.msra.mxu0 %v878
    %909 = vmatpush.msra.mxu0 %v877
    %910 = vmatpush.msra.mxu0 %v876
    %911 = vmatpush.msra.mxu0 %v875
    %912 = vmatpush.msra.mxu0 %v874
    %913 = vmatpush.msra.mxu0 %v873
    %914 = vmatpush.msra.mxu0 %v872
    %915 = vmatpush.msra.mxu0 %v871
    %916 = vmatpush.msra.mxu0 %v870
    %917 = vmatpush.msra.mxu0 %v869
    %918 = vmatpush.msra.mxu0 %v868
    %919 = vmatpush.msra.mxu0 %v867
    %920 = vmatpush.msra.mxu0 %v866
    %921 = vmatpush.msra.mxu0 %v865
    %922 = vmatpush.msra.mxu0 %v864
    %923 = vmatpush.msra.mxu0 %v863
    %924 = vmatmul.f32.gmra.mxu0 %v847
    %v925 = vpop.f32.mrf.mxu0
    %v926 = vadd.f32 0.0, %v925
    %927 = vmatmul.f32.gmra.mxu0 %v849
    %v928 = vpop.f32.mrf.mxu0
    %v929 = vadd.f32 0.0, %v928
    %930 = vmatmul.f32.gmra.mxu0 %v851
    %v931 = vpop.f32.mrf.mxu0
    %v932 = vadd.f32 0.0, %v931
    %933 = vmatmul.f32.gmra.mxu0 %v853
    %v934 = vpop.f32.mrf.mxu0
    %v935 = vadd.f32 0.0, %v934
    %936 = vmatmul.f32.gmra.mxu0 %v855
    %v937 = vpop.f32.mrf.mxu0
    %v938 = vadd.f32 0.0, %v937
    %939 = vmatmul.f32.gmra.mxu0 %v857
    %v940 = vpop.f32.mrf.mxu0
    %v941 = vadd.f32 0.0, %v940
    %942 = vmatmul.f32.gmra.mxu0 %v859
    %v943 = vpop.f32.mrf.mxu0
    %v944 = vadd.f32 0.0, %v943
    %945 = vmatmul.f32.gmra.mxu0 %v861
    %v946 = vpop.f32.mrf.mxu0
    %v947 = vadd.f32 0.0, %v946
    %948 = vdwg.mxu0
    %949 = vmatpush.msra.mxu0 0.0
    %950 = vmatpush.msra.mxu0 0.0
    %951 = vmatpush.msra.mxu0 0.0
    %952 = vmatpush.msra.mxu0 0.0
    %953 = vmatpush.msra.mxu0 0.0
    %954 = vmatpush.msra.mxu0 0.0
    %955 = vmatpush.msra.mxu0 0.0
    %956 = vmatpush.msra.mxu0 0.0
    %957 = vmatpush.msra.mxu0 0.0
    %958 = vmatpush.msra.mxu0 0.0
    %959 = vmatpush.msra.mxu0 0.0
    %960 = vmatpush.msra.mxu0 %v883
    %961 = vmatpush.msra.mxu0 %v882
    %962 = vmatpush.msra.mxu0 %v881
    %963 = vmatpush.msra.mxu0 %v880
    %964 = vmatpush.msra.mxu0 %v879
    %965 = vmatmul.f32.gmra.mxu0 %v885
    %v966 = vpop.f32.mrf.mxu0
    %v967 = vadd.f32 %v926, %v966
    %968 = vmatmul.f32.gmra.mxu0 %v888
    %v969 = vpop.f32.mrf.mxu0
    %v970 = vadd.f32 %v929, %v969
    %971 = vmatmul.f32.gmra.mxu0 %v891
    %v972 = vpop.f32.mrf.mxu0
    %v973 = vadd.f32 %v932, %v972
    %974 = vmatmul.f32.gmra.mxu0 %v894
    %v975 = vpop.f32.mrf.mxu0
    %v976 = vadd.f32 %v935, %v975
    %977 = vmatmul.f32.gmra.mxu0 %v897
    %v978 = vpop.f32.mrf.mxu0
    %v979 = vadd.f32 %v938, %v978
    %980 = vmatmul.f32.gmra.mxu0 %v900
    %v981 = vpop.f32.mrf.mxu0
    %v982 = vadd.f32 %v941, %v981
    %983 = vmatmul.f32.gmra.mxu0 %v903
    %v984 = vpop.f32.mrf.mxu0
    %v985 = vadd.f32 %v944, %v984
    %986 = vmatmul.f32.gmra.mxu0 %v906
    %v987 = vpop.f32.mrf.mxu0
    %v988 = vadd.f32 %v947, %v987
    %989 = vdwg.mxu0
    %vm990 = vcmask 687104
    %991 = vst.msk [vmem:[#allocation3] sm:$0xff] %vm990, %v967
    %992 = vst.msk [vmem:[#allocation3 + $0x8] sm:$0xff] %vm990, %v970
    %993 = vst.msk [vmem:[#allocation3 + $0x10] sm:$0xff] %vm990, %v973
    %994 = vst.msk [vmem:[#allocation3 + $0x18] sm:$0xff] %vm990, %v976
    %995 = vst.msk [vmem:[#allocation3 + $0x20] sm:$0xff] %vm990, %v979
    %996 = vst.msk [vmem:[#allocation3 + $0x28] sm:$0xff] %vm990, %v982
    %997 = vst.msk [vmem:[#allocation3 + $0x30] sm:$0xff] %vm990, %v985
    %vm998 = vcmask 681984
    %999 = vst.msk [vmem:[#allocation3 + $0x38] sm:$0x7] %vm998, %v988
    %v1000 = vld [vmem:[#allocation3] sm:$0xff]
    %v1001 = vld [vmem:[#allocation3 + $0x8] sm:$0xff]
    %v1002 = vld [vmem:[#allocation3 + $0x10] sm:$0xff]
    %v1003 = vld [vmem:[#allocation3 + $0x18] sm:$0xff]
    %v1004 = vld [vmem:[#allocation3 + $0x20] sm:$0xff]
    %v1005 = vld [vmem:[#allocation3 + $0x28] sm:$0xff]
    %v1006 = vld [vmem:[#allocation3 + $0x30] sm:$0x7]
    %v1007 = vld [vmem:[%s4] sm:$0xff]
    %v1008 = vld [vmem:[%s4 + $0x8] sm:$0xff]
    %v1009 = vld [vmem:[%s4 + $0x10] sm:$0xff]
    %v1010 = vld [vmem:[%s4 + $0x18] sm:$0xff]
    %v1011 = vld [vmem:[%s4 + $0x20] sm:$0xff]
    %v1012 = vld [vmem:[%s4 + $0x28] sm:$0xff]
    %v1013 = vld [vmem:[%s4 + $0x30] sm:$0xff]
    %v1014 = vld [vmem:[%s4 + $0x38] sm:$0xff]
    %v1015 = vld [vmem:[%s4 + $0x40] sm:$0xff]
    %v1016 = vld [vmem:[%s4 + $0x48] sm:$0xff]
    %v1017 = vld [vmem:[%s4 + $0x50] sm:$0xff]
    %v1018 = vld [vmem:[%s4 + $0x58] sm:$0xff]
    %v1019 = vld [vmem:[%s4 + $0x60] sm:$0xff]
    %v1020 = vld [vmem:[%s4 + $0x68] sm:$0xff]
    %v1021 = vld [vmem:[%s4 + $0x70] sm:$0xff]
    %v1022 = vld [vmem:[%s4 + $0x78] sm:$0xff]
    %v1023 = vld [vmem:[%s4 + $0x80] sm:$0xff]
    %v1024 = vld [vmem:[%s4 + $0x88] sm:$0xff]
    %v1025 = vld [vmem:[%s4 + $0x90] sm:$0xff]
    %v1026 = vld [vmem:[%s4 + $0x98] sm:$0xff]
    %v1027 = vld [vmem:[%s4 + $0xa0] sm:$0xf]
    %v1028 = vld [vmem:[%s4 + $0xa8] sm:$0xf]
    %v1029 = vld [vmem:[#allocation3 + $0x2] sm:$0xff]
    %v1030 = vld [vmem:[#allocation3 + $0xa] sm:$0xff]
    %v1031 = vld [vmem:[#allocation3 + $0x12] sm:$0xff]
    %v1032 = vld [vmem:[#allocation3 + $0x1a] sm:$0xff]
    %v1033 = vld [vmem:[#allocation3 + $0x22] sm:$0xff]
    %v1034 = vld [vmem:[#allocation3 + $0x2a] sm:$0xff]
    %v1035 = vld [vmem:[#allocation3 + $0x32] sm:$0x7]
    %s1036 = scalar_lea.vmem %s4, 176
    %v1037 = vld [vmem:[%s1036] sm:$0xff]
    %v1038 = vld [vmem:[%s1036 + $0x8] sm:$0xff]
    %v1039 = vld [vmem:[%s1036 + $0x10] sm:$0xff]
    %v1040 = vld [vmem:[%s1036 + $0x18] sm:$0xff]
    %v1041 = vld [vmem:[%s1036 + $0x20] sm:$0xff]
    %v1042 = vld [vmem:[%s1036 + $0x28] sm:$0xff]
    %v1043 = vld [vmem:[%s1036 + $0x30] sm:$0xff]
    %v1044 = vld [vmem:[%s1036 + $0x38] sm:$0xff]
    %v1045 = vld [vmem:[%s1036 + $0x40] sm:$0xff]
    %v1046 = vld [vmem:[%s1036 + $0x48] sm:$0xff]
    %v1047 = vld [vmem:[%s1036 + $0x50] sm:$0xff]
    %v1048 = vld [vmem:[%s1036 + $0x58] sm:$0xff]
    %v1049 = vld [vmem:[%s1036 + $0x60] sm:$0xff]
    %v1050 = vld [vmem:[%s1036 + $0x68] sm:$0xff]
    %v1051 = vld [vmem:[%s1036 + $0x70] sm:$0xff]
    %v1052 = vld [vmem:[%s1036 + $0x78] sm:$0xff]
    %v1053 = vld [vmem:[%s1036 + $0x80] sm:$0xff]
    %v1054 = vld [vmem:[%s1036 + $0x88] sm:$0xff]
    %v1055 = vld [vmem:[%s1036 + $0x90] sm:$0xff]
    %v1056 = vld [vmem:[%s1036 + $0x98] sm:$0xff]
    %v1057 = vld [vmem:[%s1036 + $0xa0] sm:$0xf]
    %v1058 = vld [vmem:[%s1036 + $0xa8] sm:$0xf]
    %v1060 = vsel %vm990, %v1029, 0
    %v1063 = vsel %vm990, %v1030, 0
    %v1066 = vsel %vm990, %v1031, 0
    %v1069 = vsel %vm990, %v1032, 0
    %v1072 = vsel %vm990, %v1033, 0
    %v1075 = vsel %vm990, %v1034, 0
    %v1078 = vsel %vm990, %v1035, 0
    %vm1080 = vcmask 1043456
    %v1082 = vsel %vm1080, %v1057, 0
    %v1085 = vsel %vm1080, %v1058, 0
    %1087 = vmatpush.msra.mxu0 0.0
    %1088 = vmatpush.msra.mxu0 0.0
    %1089 = vmatpush.msra.mxu0 0.0
    %1090 = vmatpush.msra.mxu0 0.0
    %1091 = vmatpush.msra.mxu0 0.0
    %1092 = vmatpush.msra.mxu0 %v1082
    %1093 = vmatpush.msra.mxu0 %v1055
    %1094 = vmatpush.msra.mxu0 %v1053
    %1095 = vmatpush.msra.mxu0 %v1051
    %1096 = vmatpush.msra.mxu0 %v1049
    %1097 = vmatpush.msra.mxu0 %v1047
    %1098 = vmatpush.msra.mxu0 %v1045
    %1099 = vmatpush.msra.mxu0 %v1043
    %1100 = vmatpush.msra.mxu0 %v1041
    %1101 = vmatpush.msra.mxu0 %v1039
    %1102 = vmatpush.msra.mxu0 %v1037
    %1103 = vmatmul.f32.gmra.mxu0 %v1060
    %v1104 = vpop.f32.mrf.mxu0
    %v1105 = vadd.f32 0.0, %v1104
    %1106 = vmatmul.f32.gmra.mxu0 %v1063
    %v1107 = vpop.f32.mrf.mxu0
    %v1108 = vadd.f32 0.0, %v1107
    %1109 = vmatmul.f32.gmra.mxu0 %v1066
    %v1110 = vpop.f32.mrf.mxu0
    %v1111 = vadd.f32 0.0, %v1110
    %1112 = vmatmul.f32.gmra.mxu0 %v1069
    %v1113 = vpop.f32.mrf.mxu0
    %v1114 = vadd.f32 0.0, %v1113
    %1115 = vmatmul.f32.gmra.mxu0 %v1072
    %v1116 = vpop.f32.mrf.mxu0
    %v1117 = vadd.f32 0.0, %v1116
    %1118 = vmatmul.f32.gmra.mxu0 %v1075
    %v1119 = vpop.f32.mrf.mxu0
    %v1120 = vadd.f32 0.0, %v1119
    %1121 = vmatmul.f32.gmra.mxu0 %v1078
    %v1122 = vpop.f32.mrf.mxu0
    %v1123 = vadd.f32 0.0, %v1122
    %1124 = vdwg.mxu0
    %1125 = vmatpush.msra.mxu0 0.0
    %1126 = vmatpush.msra.mxu0 0.0
    %1127 = vmatpush.msra.mxu0 0.0
    %1128 = vmatpush.msra.mxu0 0.0
    %1129 = vmatpush.msra.mxu0 0.0
    %1130 = vmatpush.msra.mxu0 %v1085
    %1131 = vmatpush.msra.mxu0 %v1056
    %1132 = vmatpush.msra.mxu0 %v1054
    %1133 = vmatpush.msra.mxu0 %v1052
    %1134 = vmatpush.msra.mxu0 %v1050
    %1135 = vmatpush.msra.mxu0 %v1048
    %1136 = vmatpush.msra.mxu0 %v1046
    %1137 = vmatpush.msra.mxu0 %v1044
    %1138 = vmatpush.msra.mxu0 %v1042
    %1139 = vmatpush.msra.mxu0 %v1040
    %1140 = vmatpush.msra.mxu0 %v1038
    %1141 = vmatmul.f32.gmra.mxu0 %v1060
    %v1142 = vpop.f32.mrf.mxu0
    %v1143 = vadd.f32 0.0, %v1142
    %1144 = vmatmul.f32.gmra.mxu0 %v1063
    %v1145 = vpop.f32.mrf.mxu0
    %v1146 = vadd.f32 0.0, %v1145
    %1147 = vmatmul.f32.gmra.mxu0 %v1066
    %v1148 = vpop.f32.mrf.mxu0
    %v1149 = vadd.f32 0.0, %v1148
    %1150 = vmatmul.f32.gmra.mxu0 %v1069
    %v1151 = vpop.f32.mrf.mxu0
    %v1152 = vadd.f32 0.0, %v1151
    %1153 = vmatmul.f32.gmra.mxu0 %v1072
    %v1154 = vpop.f32.mrf.mxu0
    %v1155 = vadd.f32 0.0, %v1154
    %1156 = vmatmul.f32.gmra.mxu0 %v1075
    %v1157 = vpop.f32.mrf.mxu0
    %v1158 = vadd.f32 0.0, %v1157
    %1159 = vmatmul.f32.gmra.mxu0 %v1078
    %v1160 = vpop.f32.mrf.mxu0
    %v1161 = vadd.f32 0.0, %v1160
    %1162 = vdwg.mxu0
    %v1164 = vsel %vm990, %v1000, 0
    %v1167 = vsel %vm990, %v1001, 0
    %v1170 = vsel %vm990, %v1002, 0
    %v1173 = vsel %vm990, %v1003, 0
    %v1176 = vsel %vm990, %v1004, 0
    %v1179 = vsel %vm990, %v1005, 0
    %v1182 = vsel %vm990, %v1006, 0
    %v1185 = vsel %vm1080, %v1027, 0
    %v1188 = vsel %vm1080, %v1028, 0
    %1190 = vmatpush.msra.mxu0 0.0
    %1191 = vmatpush.msra.mxu0 0.0
    %1192 = vmatpush.msra.mxu0 0.0
    %1193 = vmatpush.msra.mxu0 0.0
    %1194 = vmatpush.msra.mxu0 0.0
    %1195 = vmatpush.msra.mxu0 %v1185
    %1196 = vmatpush.msra.mxu0 %v1025
    %1197 = vmatpush.msra.mxu0 %v1023
    %1198 = vmatpush.msra.mxu0 %v1021
    %1199 = vmatpush.msra.mxu0 %v1019
    %1200 = vmatpush.msra.mxu0 %v1017
    %1201 = vmatpush.msra.mxu0 %v1015
    %1202 = vmatpush.msra.mxu0 %v1013
    %1203 = vmatpush.msra.mxu0 %v1011
    %1204 = vmatpush.msra.mxu0 %v1009
    %1205 = vmatpush.msra.mxu0 %v1007
    %1206 = vmatmul.f32.gmra.mxu0 %v1164
    %v1207 = vpop.f32.mrf.mxu0
    %v1208 = vadd.f32 %v1105, %v1207
    %1209 = vmatmul.f32.gmra.mxu0 %v1167
    %v1210 = vpop.f32.mrf.mxu0
    %v1211 = vadd.f32 %v1108, %v1210
    %1212 = vmatmul.f32.gmra.mxu0 %v1170
    %v1213 = vpop.f32.mrf.mxu0
    %v1214 = vadd.f32 %v1111, %v1213
    %1215 = vmatmul.f32.gmra.mxu0 %v1173
    %v1216 = vpop.f32.mrf.mxu0
    %v1217 = vadd.f32 %v1114, %v1216
    %1218 = vmatmul.f32.gmra.mxu0 %v1176
    %v1219 = vpop.f32.mrf.mxu0
    %v1220 = vadd.f32 %v1117, %v1219
    %1221 = vmatmul.f32.gmra.mxu0 %v1179
    %v1222 = vpop.f32.mrf.mxu0
    %v1223 = vadd.f32 %v1120, %v1222
    %1224 = vmatmul.f32.gmra.mxu0 %v1182
    %v1225 = vpop.f32.mrf.mxu0
    %v1226 = vadd.f32 %v1123, %v1225
    %1227 = vdwg.mxu0
    %1228 = vmatpush.msra.mxu0 0.0
    %1229 = vmatpush.msra.mxu0 0.0
    %1230 = vmatpush.msra.mxu0 0.0
    %1231 = vmatpush.msra.mxu0 0.0
    %1232 = vmatpush.msra.mxu0 0.0
    %1233 = vmatpush.msra.mxu0 %v1188
    %1234 = vmatpush.msra.mxu0 %v1026
    %1235 = vmatpush.msra.mxu0 %v1024
    %1236 = vmatpush.msra.mxu0 %v1022
    %1237 = vmatpush.msra.mxu0 %v1020
    %1238 = vmatpush.msra.mxu0 %v1018
    %1239 = vmatpush.msra.mxu0 %v1016
    %1240 = vmatpush.msra.mxu0 %v1014
    %1241 = vmatpush.msra.mxu0 %v1012
    %1242 = vmatpush.msra.mxu0 %v1010
    %1243 = vmatpush.msra.mxu0 %v1008
    %1244 = vmatmul.f32.gmra.mxu0 %v1164
    %v1245 = vpop.f32.mrf.mxu0
    %v1246 = vadd.f32 %v1143, %v1245
    %1247 = vmatmul.f32.gmra.mxu0 %v1167
    %v1248 = vpop.f32.mrf.mxu0
    %v1249 = vadd.f32 %v1146, %v1248
    %1250 = vmatmul.f32.gmra.mxu0 %v1170
    %v1251 = vpop.f32.mrf.mxu0
    %v1252 = vadd.f32 %v1149, %v1251
    %1253 = vmatmul.f32.gmra.mxu0 %v1173
    %v1254 = vpop.f32.mrf.mxu0
    %v1255 = vadd.f32 %v1152, %v1254
    %1256 = vmatmul.f32.gmra.mxu0 %v1176
    %v1257 = vpop.f32.mrf.mxu0
    %v1258 = vadd.f32 %v1155, %v1257
    %1259 = vmatmul.f32.gmra.mxu0 %v1179
    %v1260 = vpop.f32.mrf.mxu0
    %v1261 = vadd.f32 %v1158, %v1260
    %1262 = vmatmul.f32.gmra.mxu0 %v1182
    %v1263 = vpop.f32.mrf.mxu0
    %v1264 = vadd.f32 %v1161, %v1263
    %1265 = vdwg.mxu0
    %v1266 = vld [vmem:[#allocation3 + $0x4] sm:$0xff]
    %v1267 = vld [vmem:[#allocation3 + $0xc] sm:$0xff]
    %v1268 = vld [vmem:[#allocation3 + $0x14] sm:$0xff]
    %v1269 = vld [vmem:[#allocation3 + $0x1c] sm:$0xff]
    %v1270 = vld [vmem:[#allocation3 + $0x24] sm:$0xff]
    %v1271 = vld [vmem:[#allocation3 + $0x2c] sm:$0xff]
    %v1272 = vld [vmem:[#allocation3 + $0x34] sm:$0x7]
    %s1273 = scalar_lea.vmem %s4, 352
    %v1274 = vld [vmem:[%s1273] sm:$0xff]
    %v1275 = vld [vmem:[%s1273 + $0x8] sm:$0xff]
    %v1276 = vld [vmem:[%s1273 + $0x10] sm:$0xff]
    %v1277 = vld [vmem:[%s1273 + $0x18] sm:$0xff]
    %v1278 = vld [vmem:[%s1273 + $0x20] sm:$0xff]
    %v1279 = vld [vmem:[%s1273 + $0x28] sm:$0xff]
    %v1280 = vld [vmem:[%s1273 + $0x30] sm:$0xff]
    %v1281 = vld [vmem:[%s1273 + $0x38] sm:$0xff]
    %v1282 = vld [vmem:[%s1273 + $0x40] sm:$0xff]
    %v1283 = vld [vmem:[%s1273 + $0x48] sm:$0xff]
    %v1284 = vld [vmem:[%s1273 + $0x50] sm:$0xff]
    %v1285 = vld [vmem:[%s1273 + $0x58] sm:$0xff]
    %v1286 = vld [vmem:[%s1273 + $0x60] sm:$0xff]
    %v1287 = vld [vmem:[%s1273 + $0x68] sm:$0xff]
    %v1288 = vld [vmem:[%s1273 + $0x70] sm:$0xff]
    %v1289 = vld [vmem:[%s1273 + $0x78] sm:$0xff]
    %v1290 = vld [vmem:[%s1273 + $0x80] sm:$0xff]
    %v1291 = vld [vmem:[%s1273 + $0x88] sm:$0xff]
    %v1292 = vld [vmem:[%s1273 + $0x90] sm:$0xff]
    %v1293 = vld [vmem:[%s1273 + $0x98] sm:$0xff]
    %v1294 = vld [vmem:[%s1273 + $0xa0] sm:$0xf]
    %v1295 = vld [vmem:[%s1273 + $0xa8] sm:$0xf]
    %v1297 = vsel %vm990, %v1266, 0
    %v1300 = vsel %vm990, %v1267, 0
    %v1303 = vsel %vm990, %v1268, 0
    %v1306 = vsel %vm990, %v1269, 0
    %v1309 = vsel %vm990, %v1270, 0
    %v1312 = vsel %vm990, %v1271, 0
    %v1315 = vsel %vm990, %v1272, 0
    %v1318 = vsel %vm1080, %v1294, 0
    %v1321 = vsel %vm1080, %v1295, 0
    %1323 = vmatpush.msra.mxu0 0.0
    %1324 = vmatpush.msra.mxu0 0.0
    %1325 = vmatpush.msra.mxu0 0.0
    %1326 = vmatpush.msra.mxu0 0.0
    %1327 = vmatpush.msra.mxu0 0.0
    %1328 = vmatpush.msra.mxu0 %v1318
    %1329 = vmatpush.msra.mxu0 %v1292
    %1330 = vmatpush.msra.mxu0 %v1290
    %1331 = vmatpush.msra.mxu0 %v1288
    %1332 = vmatpush.msra.mxu0 %v1286
    %1333 = vmatpush.msra.mxu0 %v1284
    %1334 = vmatpush.msra.mxu0 %v1282
    %1335 = vmatpush.msra.mxu0 %v1280
    %1336 = vmatpush.msra.mxu0 %v1278
    %1337 = vmatpush.msra.mxu0 %v1276
    %1338 = vmatpush.msra.mxu0 %v1274
    %1339 = vmatmul.f32.gmra.mxu0 %v1297
    %v1340 = vpop.f32.mrf.mxu0
    %v1341 = vadd.f32 0.0, %v1340
    %1342 = vmatmul.f32.gmra.mxu0 %v1300
    %v1343 = vpop.f32.mrf.mxu0
    %v1344 = vadd.f32 0.0, %v1343
    %1345 = vmatmul.f32.gmra.mxu0 %v1303
    %v1346 = vpop.f32.mrf.mxu0
    %v1347 = vadd.f32 0.0, %v1346
    %1348 = vmatmul.f32.gmra.mxu0 %v1306
    %v1349 = vpop.f32.mrf.mxu0
    %v1350 = vadd.f32 0.0, %v1349
    %1351 = vmatmul.f32.gmra.mxu0 %v1309
    %v1352 = vpop.f32.mrf.mxu0
    %v1353 = vadd.f32 0.0, %v1352
    %1354 = vmatmul.f32.gmra.mxu0 %v1312
    %v1355 = vpop.f32.mrf.mxu0
    %v1356 = vadd.f32 0.0, %v1355
    %1357 = vmatmul.f32.gmra.mxu0 %v1315
    %v1358 = vpop.f32.mrf.mxu0
    %v1359 = vadd.f32 0.0, %v1358
    %1360 = vdwg.mxu0
    %1361 = vmatpush.msra.mxu0 0.0
    %1362 = vmatpush.msra.mxu0 0.0
    %1363 = vmatpush.msra.mxu0 0.0
    %1364 = vmatpush.msra.mxu0 0.0
    %1365 = vmatpush.msra.mxu0 0.0
    %1366 = vmatpush.msra.mxu0 %v1321
    %1367 = vmatpush.msra.mxu0 %v1293
    %1368 = vmatpush.msra.mxu0 %v1291
    %1369 = vmatpush.msra.mxu0 %v1289
    %1370 = vmatpush.msra.mxu0 %v1287
    %1371 = vmatpush.msra.mxu0 %v1285
    %1372 = vmatpush.msra.mxu0 %v1283
    %1373 = vmatpush.msra.mxu0 %v1281
    %1374 = vmatpush.msra.mxu0 %v1279
    %1375 = vmatpush.msra.mxu0 %v1277
    %1376 = vmatpush.msra.mxu0 %v1275
    %1377 = vmatmul.f32.gmra.mxu0 %v1297
    %v1378 = vpop.f32.mrf.mxu0
    %v1379 = vadd.f32 0.0, %v1378
    %1380 = vmatmul.f32.gmra.mxu0 %v1300
    %v1381 = vpop.f32.mrf.mxu0
    %v1382 = vadd.f32 0.0, %v1381
    %1383 = vmatmul.f32.gmra.mxu0 %v1303
    %v1384 = vpop.f32.mrf.mxu0
    %v1385 = vadd.f32 0.0, %v1384
    %1386 = vmatmul.f32.gmra.mxu0 %v1306
    %v1387 = vpop.f32.mrf.mxu0
    %v1388 = vadd.f32 0.0, %v1387
    %1389 = vmatmul.f32.gmra.mxu0 %v1309
    %v1390 = vpop.f32.mrf.mxu0
    %v1391 = vadd.f32 0.0, %v1390
    %1392 = vmatmul.f32.gmra.mxu0 %v1312
    %v1393 = vpop.f32.mrf.mxu0
    %v1394 = vadd.f32 0.0, %v1393
    %1395 = vmatmul.f32.gmra.mxu0 %v1315
    %v1396 = vpop.f32.mrf.mxu0
    %v1397 = vadd.f32 0.0, %v1396
    %1398 = vdwg.mxu0
    %v1399 = vadd.f32 %v1208, %v1341
    %v1400 = vadd.f32 %v1246, %v1379
    %v1401 = vadd.f32 %v1211, %v1344
    %v1402 = vadd.f32 %v1249, %v1382
    %v1403 = vadd.f32 %v1214, %v1347
    %v1404 = vadd.f32 %v1252, %v1385
    %v1405 = vadd.f32 %v1217, %v1350
    %v1406 = vadd.f32 %v1255, %v1388
    %v1407 = vadd.f32 %v1220, %v1353
    %v1408 = vadd.f32 %v1258, %v1391
    %v1409 = vadd.f32 %v1223, %v1356
    %v1410 = vadd.f32 %v1261, %v1394
    %v1411 = vadd.f32 %v1226, %v1359
    %v1412 = vadd.f32 %v1264, %v1397
    %v1413 = vld [vmem:[#allocation3 + $0x6] sm:$0xff]
    %v1414 = vld [vmem:[#allocation3 + $0xe] sm:$0xff]
    %v1415 = vld [vmem:[#allocation3 + $0x16] sm:$0xff]
    %v1416 = vld [vmem:[#allocation3 + $0x1e] sm:$0xff]
    %v1417 = vld [vmem:[#allocation3 + $0x26] sm:$0xff]
    %v1418 = vld [vmem:[#allocation3 + $0x2e] sm:$0xff]
    %v1419 = vld [vmem:[#allocation3 + $0x36] sm:$0x7]
    %s1420 = scalar_lea.vmem %s4, 528
    %v1421 = vld [vmem:[%s1420] sm:$0xff]
    %v1422 = vld [vmem:[%s1420 + $0x8] sm:$0xff]
    %v1423 = vld [vmem:[%s1420 + $0x10] sm:$0xff]
    %v1424 = vld [vmem:[%s1420 + $0x18] sm:$0xff]
    %v1425 = vld [vmem:[%s1420 + $0x20] sm:$0xff]
    %v1426 = vld [vmem:[%s1420 + $0x28] sm:$0xff]
    %v1427 = vld [vmem:[%s1420 + $0x30] sm:$0xff]
    %v1428 = vld [vmem:[%s1420 + $0x38] sm:$0xff]
    %v1429 = vld [vmem:[%s1420 + $0x40] sm:$0xff]
    %v1430 = vld [vmem:[%s1420 + $0x48] sm:$0xff]
    %v1431 = vld [vmem:[%s1420 + $0x50] sm:$0xff]
    %v1432 = vld [vmem:[%s1420 + $0x58] sm:$0xff]
    %v1433 = vld [vmem:[%s1420 + $0x60] sm:$0xff]
    %v1434 = vld [vmem:[%s1420 + $0x68] sm:$0xff]
    %v1435 = vld [vmem:[%s1420 + $0x70] sm:$0xff]
    %v1436 = vld [vmem:[%s1420 + $0x78] sm:$0xff]
    %v1437 = vld [vmem:[%s1420 + $0x80] sm:$0xff]
    %v1438 = vld [vmem:[%s1420 + $0x88] sm:$0xff]
    %v1439 = vld [vmem:[%s1420 + $0x90] sm:$0xff]
    %v1440 = vld [vmem:[%s1420 + $0x98] sm:$0xff]
    %v1441 = vld [vmem:[%s1420 + $0xa0] sm:$0xf]
    %v1442 = vld [vmem:[%s1420 + $0xa8] sm:$0xf]
    %v1444 = vsel %vm990, %v1413, 0
    %v1447 = vsel %vm990, %v1414, 0
    %v1450 = vsel %vm990, %v1415, 0
    %v1453 = vsel %vm990, %v1416, 0
    %v1456 = vsel %vm990, %v1417, 0
    %v1459 = vsel %vm990, %v1418, 0
    %v1462 = vsel %vm990, %v1419, 0
    %v1465 = vsel %vm1080, %v1441, 0
    %v1468 = vsel %vm1080, %v1442, 0
    %1470 = vmatpush.msra.mxu0 0.0
    %1471 = vmatpush.msra.mxu0 0.0
    %1472 = vmatpush.msra.mxu0 0.0
    %1473 = vmatpush.msra.mxu0 0.0
    %1474 = vmatpush.msra.mxu0 0.0
    %1475 = vmatpush.msra.mxu0 %v1465
    %1476 = vmatpush.msra.mxu0 %v1439
    %1477 = vmatpush.msra.mxu0 %v1437
    %1478 = vmatpush.msra.mxu0 %v1435
    %1479 = vmatpush.msra.mxu0 %v1433
    %1480 = vmatpush.msra.mxu0 %v1431
    %1481 = vmatpush.msra.mxu0 %v1429
    %1482 = vmatpush.msra.mxu0 %v1427
    %1483 = vmatpush.msra.mxu0 %v1425
    %1484 = vmatpush.msra.mxu0 %v1423
    %1485 = vmatpush.msra.mxu0 %v1421
    %1486 = vmatmul.f32.gmra.mxu0 %v1444
    %v1487 = vpop.f32.mrf.mxu0
    %v1488 = vadd.f32 0.0, %v1487
    %1489 = vmatmul.f32.gmra.mxu0 %v1447
    %v1490 = vpop.f32.mrf.mxu0
    %v1491 = vadd.f32 0.0, %v1490
    %1492 = vmatmul.f32.gmra.mxu0 %v1450
    %v1493 = vpop.f32.mrf.mxu0
    %v1494 = vadd.f32 0.0, %v1493
    %1495 = vmatmul.f32.gmra.mxu0 %v1453
    %v1496 = vpop.f32.mrf.mxu0
    %v1497 = vadd.f32 0.0, %v1496
    %1498 = vmatmul.f32.gmra.mxu0 %v1456
    %v1499 = vpop.f32.mrf.mxu0
    %v1500 = vadd.f32 0.0, %v1499
    %1501 = vmatmul.f32.gmra.mxu0 %v1459
    %v1502 = vpop.f32.mrf.mxu0
    %v1503 = vadd.f32 0.0, %v1502
    %1504 = vmatmul.f32.gmra.mxu0 %v1462
    %v1505 = vpop.f32.mrf.mxu0
    %v1506 = vadd.f32 0.0, %v1505
    %1507 = vdwg.mxu0
    %1508 = vmatpush.msra.mxu0 0.0
    %1509 = vmatpush.msra.mxu0 0.0
    %1510 = vmatpush.msra.mxu0 0.0
    %1511 = vmatpush.msra.mxu0 0.0
    %1512 = vmatpush.msra.mxu0 0.0
    %1513 = vmatpush.msra.mxu0 %v1468
    %1514 = vmatpush.msra.mxu0 %v1440
    %1515 = vmatpush.msra.mxu0 %v1438
    %1516 = vmatpush.msra.mxu0 %v1436
    %1517 = vmatpush.msra.mxu0 %v1434
    %1518 = vmatpush.msra.mxu0 %v1432
    %1519 = vmatpush.msra.mxu0 %v1430
    %1520 = vmatpush.msra.mxu0 %v1428
    %1521 = vmatpush.msra.mxu0 %v1426
    %1522 = vmatpush.msra.mxu0 %v1424
    %1523 = vmatpush.msra.mxu0 %v1422
    %1524 = vmatmul.f32.gmra.mxu0 %v1444
    %v1525 = vpop.f32.mrf.mxu0
    %v1526 = vadd.f32 0.0, %v1525
    %1527 = vmatmul.f32.gmra.mxu0 %v1447
    %v1528 = vpop.f32.mrf.mxu0
    %v1529 = vadd.f32 0.0, %v1528
    %1530 = vmatmul.f32.gmra.mxu0 %v1450
    %v1531 = vpop.f32.mrf.mxu0
    %v1532 = vadd.f32 0.0, %v1531
    %1533 = vmatmul.f32.gmra.mxu0 %v1453
    %v1534 = vpop.f32.mrf.mxu0
    %v1535 = vadd.f32 0.0, %v1534
    %1536 = vmatmul.f32.gmra.mxu0 %v1456
    %v1537 = vpop.f32.mrf.mxu0
    %v1538 = vadd.f32 0.0, %v1537
    %1539 = vmatmul.f32.gmra.mxu0 %v1459
    %v1540 = vpop.f32.mrf.mxu0
    %v1541 = vadd.f32 0.0, %v1540
    %1542 = vmatmul.f32.gmra.mxu0 %v1462
    %v1543 = vpop.f32.mrf.mxu0
    %v1544 = vadd.f32 0.0, %v1543
    %1545 = vdwg.mxu0
    %v1546 = vadd.f32 %v1399, %v1488
    %v1547 = vadd.f32 %v1400, %v1526
    %v1548 = vadd.f32 %v1401, %v1491
    %v1549 = vadd.f32 %v1402, %v1529
    %v1550 = vadd.f32 %v1403, %v1494
    %v1551 = vadd.f32 %v1404, %v1532
    %v1552 = vadd.f32 %v1405, %v1497
    %v1553 = vadd.f32 %v1406, %v1535
    %v1554 = vadd.f32 %v1407, %v1500
    %v1555 = vadd.f32 %v1408, %v1538
    %v1556 = vadd.f32 %v1409, %v1503
    %v1557 = vadd.f32 %v1410, %v1541
    %v1558 = vadd.f32 %v1411, %v1506
    %v1559 = vadd.f32 %v1412, %v1544
    %v1560 = vld [vmem:[#allocation3 + $0x8] sm:$0xff]
    %v1561 = vld [vmem:[#allocation3 + $0x10] sm:$0xff]
    %v1562 = vld [vmem:[#allocation3 + $0x18] sm:$0xff]
    %v1563 = vld [vmem:[#allocation3 + $0x20] sm:$0xff]
    %v1564 = vld [vmem:[#allocation3 + $0x28] sm:$0xff]
    %v1565 = vld [vmem:[#allocation3 + $0x30] sm:$0xff]
    %v1566 = vld [vmem:[#allocation3 + $0x38] sm:$0x7]
    %s1567 = scalar_lea.vmem %s4, 704
    %v1568 = vld [vmem:[%s1567] sm:$0xff]
    %v1569 = vld [vmem:[%s1567 + $0x8] sm:$0xff]
    %v1570 = vld [vmem:[%s1567 + $0x10] sm:$0xff]
    %v1571 = vld [vmem:[%s1567 + $0x18] sm:$0xff]
    %v1572 = vld [vmem:[%s1567 + $0x20] sm:$0xff]
    %v1573 = vld [vmem:[%s1567 + $0x28] sm:$0xff]
    %v1574 = vld [vmem:[%s1567 + $0x30] sm:$0xff]
    %v1575 = vld [vmem:[%s1567 + $0x38] sm:$0xff]
    %v1576 = vld [vmem:[%s1567 + $0x40] sm:$0xff]
    %v1577 = vld [vmem:[%s1567 + $0x48] sm:$0xff]
    %v1578 = vld [vmem:[%s1567 + $0x50] sm:$0xff]
    %v1579 = vld [vmem:[%s1567 + $0x58] sm:$0xff]
    %v1580 = vld [vmem:[%s1567 + $0x60] sm:$0xff]
    %v1581 = vld [vmem:[%s1567 + $0x68] sm:$0xff]
    %v1582 = vld [vmem:[%s1567 + $0x70] sm:$0xff]
    %v1583 = vld [vmem:[%s1567 + $0x78] sm:$0xff]
    %v1584 = vld [vmem:[%s1567 + $0x80] sm:$0xff]
    %v1585 = vld [vmem:[%s1567 + $0x88] sm:$0xff]
    %v1586 = vld [vmem:[%s1567 + $0x90] sm:$0xff]
    %v1587 = vld [vmem:[%s1567 + $0x98] sm:$0xff]
    %v1588 = vld [vmem:[%s1567 + $0xa0] sm:$0xf]
    %v1589 = vld [vmem:[%s1567 + $0xa8] sm:$0xf]
    %v1591 = vsel %vm990, %v1560, 0
    %v1594 = vsel %vm990, %v1561, 0
    %v1597 = vsel %vm990, %v1562, 0
    %v1600 = vsel %vm990, %v1563, 0
    %v1603 = vsel %vm990, %v1564, 0
    %v1606 = vsel %vm990, %v1565, 0
    %v1609 = vsel %vm990, %v1566, 0
    %v1612 = vsel %vm1080, %v1588, 0
    %v1615 = vsel %vm1080, %v1589, 0
    %1617 = vmatpush.msra.mxu0 0.0
    %1618 = vmatpush.msra.mxu0 0.0
    %1619 = vmatpush.msra.mxu0 0.0
    %1620 = vmatpush.msra.mxu0 0.0
    %1621 = vmatpush.msra.mxu0 0.0
    %1622 = vmatpush.msra.mxu0 %v1612
    %1623 = vmatpush.msra.mxu0 %v1586
    %1624 = vmatpush.msra.mxu0 %v1584
    %1625 = vmatpush.msra.mxu0 %v1582
    %1626 = vmatpush.msra.mxu0 %v1580
    %1627 = vmatpush.msra.mxu0 %v1578
    %1628 = vmatpush.msra.mxu0 %v1576
    %1629 = vmatpush.msra.mxu0 %v1574
    %1630 = vmatpush.msra.mxu0 %v1572
    %1631 = vmatpush.msra.mxu0 %v1570
    %1632 = vmatpush.msra.mxu0 %v1568
    %1633 = vmatmul.f32.gmra.mxu0 %v1591
    %v1634 = vpop.f32.mrf.mxu0
    %v1635 = vadd.f32 0.0, %v1634
    %1636 = vmatmul.f32.gmra.mxu0 %v1594
    %v1637 = vpop.f32.mrf.mxu0
    %v1638 = vadd.f32 0.0, %v1637
    %1639 = vmatmul.f32.gmra.mxu0 %v1597
    %v1640 = vpop.f32.mrf.mxu0
    %v1641 = vadd.f32 0.0, %v1640
    %1642 = vmatmul.f32.gmra.mxu0 %v1600
    %v1643 = vpop.f32.mrf.mxu0
    %v1644 = vadd.f32 0.0, %v1643
    %1645 = vmatmul.f32.gmra.mxu0 %v1603
    %v1646 = vpop.f32.mrf.mxu0
    %v1647 = vadd.f32 0.0, %v1646
    %1648 = vmatmul.f32.gmra.mxu0 %v1606
    %v1649 = vpop.f32.mrf.mxu0
    %v1650 = vadd.f32 0.0, %v1649
    %1651 = vmatmul.f32.gmra.mxu0 %v1609
    %v1652 = vpop.f32.mrf.mxu0
    %v1653 = vadd.f32 0.0, %v1652
    %1654 = vdwg.mxu0
    %1655 = vmatpush.msra.mxu0 0.0
    %1656 = vmatpush.msra.mxu0 0.0
    %1657 = vmatpush.msra.mxu0 0.0
    %1658 = vmatpush.msra.mxu0 0.0
    %1659 = vmatpush.msra.mxu0 0.0
    %1660 = vmatpush.msra.mxu0 %v1615
    %1661 = vmatpush.msra.mxu0 %v1587
    %1662 = vmatpush.msra.mxu0 %v1585
    %1663 = vmatpush.msra.mxu0 %v1583
    %1664 = vmatpush.msra.mxu0 %v1581
    %1665 = vmatpush.msra.mxu0 %v1579
    %1666 = vmatpush.msra.mxu0 %v1577
    %1667 = vmatpush.msra.mxu0 %v1575
    %1668 = vmatpush.msra.mxu0 %v1573
    %1669 = vmatpush.msra.mxu0 %v1571
    %1670 = vmatpush.msra.mxu0 %v1569
    %1671 = vmatmul.f32.gmra.mxu0 %v1591
    %v1672 = vpop.f32.mrf.mxu0
    %v1673 = vadd.f32 0.0, %v1672
    %1674 = vmatmul.f32.gmra.mxu0 %v1594
    %v1675 = vpop.f32.mrf.mxu0
    %v1676 = vadd.f32 0.0, %v1675
    %1677 = vmatmul.f32.gmra.mxu0 %v1597
    %v1678 = vpop.f32.mrf.mxu0
    %v1679 = vadd.f32 0.0, %v1678
    %1680 = vmatmul.f32.gmra.mxu0 %v1600
    %v1681 = vpop.f32.mrf.mxu0
    %v1682 = vadd.f32 0.0, %v1681
    %1683 = vmatmul.f32.gmra.mxu0 %v1603
    %v1684 = vpop.f32.mrf.mxu0
    %v1685 = vadd.f32 0.0, %v1684
    %1686 = vmatmul.f32.gmra.mxu0 %v1606
    %v1687 = vpop.f32.mrf.mxu0
    %v1688 = vadd.f32 0.0, %v1687
    %1689 = vmatmul.f32.gmra.mxu0 %v1609
    %v1690 = vpop.f32.mrf.mxu0
    %v1691 = vadd.f32 0.0, %v1690
    %1692 = vdwg.mxu0
    %v1693 = vadd.f32 %v1546, %v1635
    %v1694 = vadd.f32 %v1547, %v1673
    %v1695 = vadd.f32 %v1548, %v1638
    %v1696 = vadd.f32 %v1549, %v1676
    %v1697 = vadd.f32 %v1550, %v1641
    %v1698 = vadd.f32 %v1551, %v1679
    %v1699 = vadd.f32 %v1552, %v1644
    %v1700 = vadd.f32 %v1553, %v1682
    %v1701 = vadd.f32 %v1554, %v1647
    %v1702 = vadd.f32 %v1555, %v1685
    %v1703 = vadd.f32 %v1556, %v1650
    %v1704 = vadd.f32 %v1557, %v1688
    %v1705 = vadd.f32 %v1558, %v1653
    %v1706 = vadd.f32 %v1559, %v1691
    %v1707 = vld [vmem:[%s5] sm:$0x3]
    %v1709 = vperm.slane %v1707, 0
    %v1710 = vperm.slane %v1707, 1
    %v1713 = vadd.f32 %v1693, %v1709
    %v1714 = vadd.f32 %v1694, %v1710
    %v1715 = vadd.f32 %v1695, %v1709
    %v1716 = vadd.f32 %v1696, %v1710
    %v1717 = vadd.f32 %v1697, %v1709
    %v1718 = vadd.f32 %v1698, %v1710
    %v1719 = vadd.f32 %v1699, %v1709
    %v1720 = vadd.f32 %v1700, %v1710
    %v1721 = vadd.f32 %v1701, %v1709
    %v1722 = vadd.f32 %v1702, %v1710
    %v1723 = vadd.f32 %v1703, %v1709
    %v1724 = vadd.f32 %v1704, %v1710
    %v1725 = vadd.f32 %v1705, %v1709
    %v1726 = vadd.f32 %v1706, %v1710
    %v1727 = vmax.f32 %v1713, 0.0
    %v1728 = vmax.f32 %v1714, 0.0
    %v1729 = vmax.f32 %v1715, 0.0
    %v1730 = vmax.f32 %v1716, 0.0
    %v1731 = vmax.f32 %v1717, 0.0
    %v1732 = vmax.f32 %v1718, 0.0
    %v1733 = vmax.f32 %v1719, 0.0
    %v1734 = vmax.f32 %v1720, 0.0
    %v1735 = vmax.f32 %v1721, 0.0
    %v1736 = vmax.f32 %v1722, 0.0
    %v1737 = vmax.f32 %v1723, 0.0
    %v1738 = vmax.f32 %v1724, 0.0
    %v1739 = vmax.f32 %v1725, 0.0
    %v1740 = vmax.f32 %v1726, 0.0
    %1741 = vst [vmem:[#allocation4] sm:$0xff] %v1727
    %1742 = vst.msk [vmem:[#allocation4 + $0x8] sm:$0xff] %vm78, %v1728
    %1743 = vst [vmem:[#allocation4 + $0x10] sm:$0xff] %v1729
    %1744 = vst.msk [vmem:[#allocation4 + $0x18] sm:$0xff] %vm78, %v1730
    %1745 = vst [vmem:[#allocation4 + $0x20] sm:$0xff] %v1731
    %1746 = vst.msk [vmem:[#allocation4 + $0x28] sm:$0xff] %vm78, %v1732
    %1747 = vst [vmem:[#allocation4 + $0x30] sm:$0xff] %v1733
    %1748 = vst.msk [vmem:[#allocation4 + $0x38] sm:$0xff] %vm78, %v1734
    %1749 = vst [vmem:[#allocation4 + $0x40] sm:$0xff] %v1735
    %1750 = vst.msk [vmem:[#allocation4 + $0x48] sm:$0xff] %vm78, %v1736
    %1751 = vst [vmem:[#allocation4 + $0x50] sm:$0xff] %v1737
    %1752 = vst.msk [vmem:[#allocation4 + $0x58] sm:$0xff] %vm78, %v1738
    %1753 = vst [vmem:[#allocation4 + $0x60] sm:$0x7] %v1739
    %vm1754 = vcmask 256000
    %1755 = vst.msk [vmem:[#allocation4 + $0x68] sm:$0x7] %vm1754, %v1740
    %v1756 = vld [vmem:[#allocation4] sm:$0xff]
    %v1757 = vld [vmem:[#allocation4 + $0x8] sm:$0xff]
    %v1758 = vld [vmem:[#allocation4 + $0x10] sm:$0xff]
    %v1759 = vld [vmem:[#allocation4 + $0x18] sm:$0xff]
    %v1760 = vld [vmem:[#allocation4 + $0x20] sm:$0xff]
    %v1761 = vld [vmem:[#allocation4 + $0x28] sm:$0xff]
    %v1762 = vld [vmem:[#allocation4 + $0x30] sm:$0xff]
    %v1763 = vld [vmem:[#allocation4 + $0x38] sm:$0xff]
    %v1764 = vld [vmem:[#allocation4 + $0x40] sm:$0xff]
    %v1765 = vld [vmem:[#allocation4 + $0x48] sm:$0xff]
    %v1766 = vld [vmem:[#allocation4 + $0x50] sm:$0xff]
    %v1767 = vld [vmem:[#allocation4 + $0x58] sm:$0xff]
    %v1768 = vld [vmem:[#allocation4 + $0x60] sm:$0x1]
    %v1769 = vld [vmem:[#allocation4 + $0x68] sm:$0x1]
    %v1770 = vld [vmem:[#allocation4] sm:$0xfc]
    %v1771 = vld [vmem:[#allocation4 + $0x8] sm:$0xfc]
    %v1772 = vld [vmem:[#allocation4 + $0x60] sm:$0x7]
    %v1773 = vld [vmem:[#allocation4 + $0x68] sm:$0x7]
    %vm1788 = vcmask 1045504
    %v1789 = vrot.slane %v1770, 2
    %v1790 = vrot.slane %v1758, 2
    %v1791 = vsel %vm1788, %v1789, %v1790
    %v1792 = vrot.slane %v1771, 2
    %v1793 = vrot.slane %v1759, 2
    %v1794 = vsel %vm1788, %v1792, %v1793
    %v1795 = vrot.slane %v1760, 2
    %v1796 = vsel %vm1788, %v1790, %v1795
    %v1797 = vrot.slane %v1761, 2
    %v1798 = vsel %vm1788, %v1793, %v1797
    %v1799 = vrot.slane %v1762, 2
    %v1800 = vsel %vm1788, %v1795, %v1799
    %v1801 = vrot.slane %v1763, 2
    %v1802 = vsel %vm1788, %v1797, %v1801
    %v1803 = vrot.slane %v1764, 2
    %v1804 = vsel %vm1788, %v1799, %v1803
    %v1805 = vrot.slane %v1765, 2
    %v1806 = vsel %vm1788, %v1801, %v1805
    %v1807 = vrot.slane %v1766, 2
    %v1808 = vsel %vm1788, %v1803, %v1807
    %v1809 = vrot.slane %v1767, 2
    %v1810 = vsel %vm1788, %v1805, %v1809
    %v1811 = vrot.slane %v1772, 2
    %v1812 = vsel %vm1788, %v1807, %v1811
    %v1813 = vrot.slane %v1773, 2
    %v1814 = vsel %vm1788, %v1809, %v1813
    %v1829 = vadd.f32 %v1756, %v1791
    %v1830 = vadd.f32 %v1757, %v1794
    %v1831 = vadd.f32 %v1758, %v1796
    %v1832 = vadd.f32 %v1759, %v1798
    %v1833 = vadd.f32 %v1760, %v1800
    %v1834 = vadd.f32 %v1761, %v1802
    %v1835 = vadd.f32 %v1762, %v1804
    %v1836 = vadd.f32 %v1763, %v1806
    %v1837 = vadd.f32 %v1764, %v1808
    %v1838 = vadd.f32 %v1765, %v1810
    %v1839 = vadd.f32 %v1766, %v1812
    %v1840 = vadd.f32 %v1767, %v1814
    %v1841 = vadd.f32 %v1768, %v1811
    %v1842 = vadd.f32 %v1769, %v1813
    %v1843 = vld [vmem:[%s6] sm:$0xff]
    %v1844 = vld [vmem:[%s6 + $0x8] sm:$0xff]
    %v1845 = vld [vmem:[%s6 + $0x10] sm:$0xff]
    %v1846 = vld [vmem:[%s6 + $0x18] sm:$0xff]
    %v1847 = vld [vmem:[%s6 + $0x20] sm:$0xff]
    %v1848 = vld [vmem:[%s6 + $0x28] sm:$0xff]
    %v1849 = vld [vmem:[%s6 + $0x30] sm:$0xff]
    %v1850 = vld [vmem:[%s6 + $0x38] sm:$0xff]
    %v1851 = vld [vmem:[%s6 + $0x40] sm:$0xff]
    %v1852 = vld [vmem:[%s6 + $0x48] sm:$0xff]
    %v1853 = vld [vmem:[%s6 + $0x50] sm:$0xff]
    %v1854 = vld [vmem:[%s6 + $0x58] sm:$0xff]
    %v1855 = vld [vmem:[%s6 + $0x60] sm:$0xff]
    %v1856 = vld [vmem:[%s6 + $0x68] sm:$0xff]
    %v1857 = vld [vmem:[%s6 + $0x70] sm:$0xff]
    %v1858 = vld [vmem:[%s6 + $0x78] sm:$0xff]
    %v1859 = vld [vmem:[%s6 + $0x80] sm:$0xff]
    %v1860 = vld [vmem:[%s6 + $0x88] sm:$0xff]
    %v1861 = vld [vmem:[%s6 + $0x90] sm:$0xff]
    %v1862 = vld [vmem:[%s6 + $0x98] sm:$0xff]
    %v1864 = vsel %vm78, %v1830, 0
    %v1867 = vsel %vm78, %v1832, 0
    %v1870 = vsel %vm78, %v1834, 0
    %v1873 = vsel %vm78, %v1836, 0
    %v1876 = vsel %vm78, %v1838, 0
    %v1879 = vsel %vm78, %v1840, 0
    %v1882 = vsel %vm78, %v1842, 0
    %1884 = vmatpush.msra.mxu0 %v1858
    %1885 = vmatpush.msra.mxu0 %v1857
    %1886 = vmatpush.msra.mxu0 %v1856
    %1887 = vmatpush.msra.mxu0 %v1855
    %1888 = vmatpush.msra.mxu0 %v1854
    %1889 = vmatpush.msra.mxu0 %v1853
    %1890 = vmatpush.msra.mxu0 %v1852
    %1891 = vmatpush.msra.mxu0 %v1851
    %1892 = vmatpush.msra.mxu0 %v1850
    %1893 = vmatpush.msra.mxu0 %v1849
    %1894 = vmatpush.msra.mxu0 %v1848
    %1895 = vmatpush.msra.mxu0 %v1847
    %1896 = vmatpush.msra.mxu0 %v1846
    %1897 = vmatpush.msra.mxu0 %v1845
    %1898 = vmatpush.msra.mxu0 %v1844
    %1899 = vmatpush.msra.mxu0 %v1843
    %1900 = vmatmul.f32.gmra.mxu0 %v1829
    %v1901 = vpop.f32.mrf.mxu0
    %v1902 = vadd.f32 0.0, %v1901
    %1903 = vmatmul.f32.gmra.mxu0 %v1831
    %v1904 = vpop.f32.mrf.mxu0
    %v1905 = vadd.f32 0.0, %v1904
    %1906 = vmatmul.f32.gmra.mxu0 %v1833
    %v1907 = vpop.f32.mrf.mxu0
    %v1908 = vadd.f32 0.0, %v1907
    %1909 = vmatmul.f32.gmra.mxu0 %v1835
    %v1910 = vpop.f32.mrf.mxu0
    %v1911 = vadd.f32 0.0, %v1910
    %1912 = vmatmul.f32.gmra.mxu0 %v1837
    %v1913 = vpop.f32.mrf.mxu0
    %v1914 = vadd.f32 0.0, %v1913
    %1915 = vmatmul.f32.gmra.mxu0 %v1839
    %v1916 = vpop.f32.mrf.mxu0
    %v1917 = vadd.f32 0.0, %v1916
    %1918 = vmatmul.f32.gmra.mxu0 %v1841
    %v1919 = vpop.f32.mrf.mxu0
    %v1920 = vadd.f32 0.0, %v1919
    %1921 = vdwg.mxu0
    %1922 = vmatpush.msra.mxu0 0.0
    %1923 = vmatpush.msra.mxu0 0.0
    %1924 = vmatpush.msra.mxu0 0.0
    %1925 = vmatpush.msra.mxu0 0.0
    %1926 = vmatpush.msra.mxu0 0.0
    %1927 = vmatpush.msra.mxu0 0.0
    %1928 = vmatpush.msra.mxu0 0.0
    %1929 = vmatpush.msra.mxu0 0.0
    %1930 = vmatpush.msra.mxu0 0.0
    %1931 = vmatpush.msra.mxu0 0.0
    %1932 = vmatpush.msra.mxu0 0.0
    %1933 = vmatpush.msra.mxu0 0.0
    %1934 = vmatpush.msra.mxu0 %v1862
    %1935 = vmatpush.msra.mxu0 %v1861
    %1936 = vmatpush.msra.mxu0 %v1860
    %1937 = vmatpush.msra.mxu0 %v1859
    %1938 = vmatmul.f32.gmra.mxu0 %v1864
    %v1939 = vpop.f32.mrf.mxu0
    %v1940 = vadd.f32 %v1902, %v1939
    %1941 = vmatmul.f32.gmra.mxu0 %v1867
    %v1942 = vpop.f32.mrf.mxu0
    %v1943 = vadd.f32 %v1905, %v1942
    %1944 = vmatmul.f32.gmra.mxu0 %v1870
    %v1945 = vpop.f32.mrf.mxu0
    %v1946 = vadd.f32 %v1908, %v1945
    %1947 = vmatmul.f32.gmra.mxu0 %v1873
    %v1948 = vpop.f32.mrf.mxu0
    %v1949 = vadd.f32 %v1911, %v1948
    %1950 = vmatmul.f32.gmra.mxu0 %v1876
    %v1951 = vpop.f32.mrf.mxu0
    %v1952 = vadd.f32 %v1914, %v1951
    %1953 = vmatmul.f32.gmra.mxu0 %v1879
    %v1954 = vpop.f32.mrf.mxu0
    %v1955 = vadd.f32 %v1917, %v1954
    %1956 = vmatmul.f32.gmra.mxu0 %v1882
    %v1957 = vpop.f32.mrf.mxu0
    %v1958 = vadd.f32 %v1920, %v1957
    %1959 = vdwg.mxu0
    %vm1960 = vcmask 654336
    %1961 = vst.msk [vmem:[#allocation5] sm:$0xff] %vm1960, %v1940
    %1962 = vst.msk [vmem:[#allocation5 + $0x8] sm:$0xff] %vm1960, %v1943
    %1963 = vst.msk [vmem:[#allocation5 + $0x10] sm:$0xff] %vm1960, %v1946
    %1964 = vst.msk [vmem:[#allocation5 + $0x18] sm:$0xff] %vm1960, %v1949
    %1965 = vst.msk [vmem:[#allocation5 + $0x20] sm:$0xff] %vm1960, %v1952
    %1966 = vst.msk [vmem:[#allocation5 + $0x28] sm:$0xff] %vm1960, %v1955
    %vm1967 = vcmask 647168
    %1968 = vst.msk [vmem:[#allocation5 + $0x30] sm:$0x1] %vm1967, %v1958
    %v1969 = vld [vmem:[#allocation5] sm:$0x1]
    %v1970 = vld [vmem:[%s7] sm:$0xff]
    %v1971 = vld [vmem:[%s7 + $0x8] sm:$0xff]
    %v1972 = vld [vmem:[%s7 + $0x10] sm:$0xff]
    %v1973 = vld [vmem:[%s7 + $0x18] sm:$0xff]
    %v1974 = vld [vmem:[%s7 + $0x20] sm:$0xff]
    %v1975 = vld [vmem:[%s7 + $0x28] sm:$0xff]
    %v1976 = vld [vmem:[%s7 + $0x30] sm:$0xff]
    %v1977 = vld [vmem:[%s7 + $0x38] sm:$0xff]
    %v1978 = vld [vmem:[%s7 + $0x40] sm:$0xff]
    %v1979 = vld [vmem:[%s7 + $0x48] sm:$0xff]
    %v1980 = vld [vmem:[#allocation5 + $0x4] sm:$0x1]
    %s1981 = scalar_lea.vmem %s7, 80
    %v1982 = vld [vmem:[%s1981] sm:$0xff]
    %v1983 = vld [vmem:[%s1981 + $0x8] sm:$0xff]
    %v1984 = vld [vmem:[%s1981 + $0x10] sm:$0xff]
    %v1985 = vld [vmem:[%s1981 + $0x18] sm:$0xff]
    %v1986 = vld [vmem:[%s1981 + $0x20] sm:$0xff]
    %v1987 = vld [vmem:[%s1981 + $0x28] sm:$0xff]
    %v1988 = vld [vmem:[%s1981 + $0x30] sm:$0xff]
    %v1989 = vld [vmem:[%s1981 + $0x38] sm:$0xff]
    %v1990 = vld [vmem:[%s1981 + $0x40] sm:$0xff]
    %v1991 = vld [vmem:[%s1981 + $0x48] sm:$0xff]
    %v1993 = vsel %vm1960, %v1980, 0
    %1995 = vmatpush.msra.mxu0 0.0
    %1996 = vmatpush.msra.mxu0 0.0
    %1997 = vmatpush.msra.mxu0 0.0
    %1998 = vmatpush.msra.mxu0 0.0
    %1999 = vmatpush.msra.mxu0 0.0
    %2000 = vmatpush.msra.mxu0 0.0
    %2001 = vmatpush.msra.mxu0 %v1991
    %2002 = vmatpush.msra.mxu0 %v1990
    %2003 = vmatpush.msra.mxu0 %v1989
    %2004 = vmatpush.msra.mxu0 %v1988
    %2005 = vmatpush.msra.mxu0 %v1987
    %2006 = vmatpush.msra.mxu0 %v1986
    %2007 = vmatpush.msra.mxu0 %v1985
    %2008 = vmatpush.msra.mxu0 %v1984
    %2009 = vmatpush.msra.mxu0 %v1983
    %2010 = vmatpush.msra.mxu0 %v1982
    %2011 = vmatmul.f32.gmra.mxu0 %v1993
    %v2012 = vpop.f32.mrf.mxu0
    %v2013 = vadd.f32 0.0, %v2012
    %2014 = vdwg.mxu0
    %v2016 = vsel %vm1960, %v1969, 0
    %2018 = vmatpush.msra.mxu0 0.0
    %2019 = vmatpush.msra.mxu0 0.0
    %2020 = vmatpush.msra.mxu0 0.0
    %2021 = vmatpush.msra.mxu0 0.0
    %2022 = vmatpush.msra.mxu0 0.0
    %2023 = vmatpush.msra.mxu0 0.0
    %2024 = vmatpush.msra.mxu0 %v1979
    %2025 = vmatpush.msra.mxu0 %v1978
    %2026 = vmatpush.msra.mxu0 %v1977
    %2027 = vmatpush.msra.mxu0 %v1976
    %2028 = vmatpush.msra.mxu0 %v1975
    %2029 = vmatpush.msra.mxu0 %v1974
    %2030 = vmatpush.msra.mxu0 %v1973
    %2031 = vmatpush.msra.mxu0 %v1972
    %2032 = vmatpush.msra.mxu0 %v1971
    %2033 = vmatpush.msra.mxu0 %v1970
    %2034 = vmatmul.f32.gmra.mxu0 %v2016
    %v2035 = vpop.f32.mrf.mxu0
    %v2036 = vadd.f32 %v2013, %v2035
    %2037 = vdwg.mxu0
    %v2038 = vld [vmem:[#allocation5 + $0x8] sm:$0x1]
    %s2039 = scalar_lea.vmem %s7, 160
    %v2040 = vld [vmem:[%s2039] sm:$0xff]
    %v2041 = vld [vmem:[%s2039 + $0x8] sm:$0xff]
    %v2042 = vld [vmem:[%s2039 + $0x10] sm:$0xff]
    %v2043 = vld [vmem:[%s2039 + $0x18] sm:$0xff]
    %v2044 = vld [vmem:[%s2039 + $0x20] sm:$0xff]
    %v2045 = vld [vmem:[%s2039 + $0x28] sm:$0xff]
    %v2046 = vld [vmem:[%s2039 + $0x30] sm:$0xff]
    %v2047 = vld [vmem:[%s2039 + $0x38] sm:$0xff]
    %v2048 = vld [vmem:[%s2039 + $0x40] sm:$0xff]
    %v2049 = vld [vmem:[%s2039 + $0x48] sm:$0xff]
    %v2051 = vsel %vm1960, %v2038, 0
    %2053 = vmatpush.msra.mxu0 0.0
    %2054 = vmatpush.msra.mxu0 0.0
    %2055 = vmatpush.msra.mxu0 0.0
    %2056 = vmatpush.msra.mxu0 0.0
    %2057 = vmatpush.msra.mxu0 0.0
    %2058 = vmatpush.msra.mxu0 0.0
    %2059 = vmatpush.msra.mxu0 %v2049
    %2060 = vmatpush.msra.mxu0 %v2048
    %2061 = vmatpush.msra.mxu0 %v2047
    %2062 = vmatpush.msra.mxu0 %v2046
    %2063 = vmatpush.msra.mxu0 %v2045
    %2064 = vmatpush.msra.mxu0 %v2044
    %2065 = vmatpush.msra.mxu0 %v2043
    %2066 = vmatpush.msra.mxu0 %v2042
    %2067 = vmatpush.msra.mxu0 %v2041
    %2068 = vmatpush.msra.mxu0 %v2040
    %2069 = vmatmul.f32.gmra.mxu0 %v2051
    %v2070 = vpop.f32.mrf.mxu0
    %v2071 = vadd.f32 0.0, %v2070
    %2072 = vdwg.mxu0
    %v2073 = vadd.f32 %v2036, %v2071
    %v2074 = vld [vmem:[#allocation5 + $0xc] sm:$0x1]
    %s2075 = scalar_lea.vmem %s7, 240
    %v2076 = vld [vmem:[%s2075] sm:$0xff]
    %v2077 = vld [vmem:[%s2075 + $0x8] sm:$0xff]
    %v2078 = vld [vmem:[%s2075 + $0x10] sm:$0xff]
    %v2079 = vld [vmem:[%s2075 + $0x18] sm:$0xff]
    %v2080 = vld [vmem:[%s2075 + $0x20] sm:$0xff]
    %v2081 = vld [vmem:[%s2075 + $0x28] sm:$0xff]
    %v2082 = vld [vmem:[%s2075 + $0x30] sm:$0xff]
    %v2083 = vld [vmem:[%s2075 + $0x38] sm:$0xff]
    %v2084 = vld [vmem:[%s2075 + $0x40] sm:$0xff]
    %v2085 = vld [vmem:[%s2075 + $0x48] sm:$0xff]
    %v2087 = vsel %vm1960, %v2074, 0
    %2089 = vmatpush.msra.mxu0 0.0
    %2090 = vmatpush.msra.mxu0 0.0
    %2091 = vmatpush.msra.mxu0 0.0
    %2092 = vmatpush.msra.mxu0 0.0
    %2093 = vmatpush.msra.mxu0 0.0
    %2094 = vmatpush.msra.mxu0 0.0
    %2095 = vmatpush.msra.mxu0 %v2085
    %2096 = vmatpush.msra.mxu0 %v2084
    %2097 = vmatpush.msra.mxu0 %v2083
    %2098 = vmatpush.msra.mxu0 %v2082
    %2099 = vmatpush.msra.mxu0 %v2081
    %2100 = vmatpush.msra.mxu0 %v2080
    %2101 = vmatpush.msra.mxu0 %v2079
    %2102 = vmatpush.msra.mxu0 %v2078
    %2103 = vmatpush.msra.mxu0 %v2077
    %2104 = vmatpush.msra.mxu0 %v2076
    %2105 = vmatmul.f32.gmra.mxu0 %v2087
    %v2106 = vpop.f32.mrf.mxu0
    %v2107 = vadd.f32 0.0, %v2106
    %2108 = vdwg.mxu0
    %v2109 = vadd.f32 %v2073, %v2107
    %v2110 = vld [vmem:[#allocation5 + $0x10] sm:$0x1]
    %s2111 = scalar_lea.vmem %s7, 320
    %v2112 = vld [vmem:[%s2111] sm:$0xff]
    %v2113 = vld [vmem:[%s2111 + $0x8] sm:$0xff]
    %v2114 = vld [vmem:[%s2111 + $0x10] sm:$0xff]
    %v2115 = vld [vmem:[%s2111 + $0x18] sm:$0xff]
    %v2116 = vld [vmem:[%s2111 + $0x20] sm:$0xff]
    %v2117 = vld [vmem:[%s2111 + $0x28] sm:$0xff]
    %v2118 = vld [vmem:[%s2111 + $0x30] sm:$0xff]
    %v2119 = vld [vmem:[%s2111 + $0x38] sm:$0xff]
    %v2120 = vld [vmem:[%s2111 + $0x40] sm:$0xff]
    %v2121 = vld [vmem:[%s2111 + $0x48] sm:$0xff]
    %v2123 = vsel %vm1960, %v2110, 0
    %2125 = vmatpush.msra.mxu0 0.0
    %2126 = vmatpush.msra.mxu0 0.0
    %2127 = vmatpush.msra.mxu0 0.0
    %2128 = vmatpush.msra.mxu0 0.0
    %2129 = vmatpush.msra.mxu0 0.0
    %2130 = vmatpush.msra.mxu0 0.0
    %2131 = vmatpush.msra.mxu0 %v2121
    %2132 = vmatpush.msra.mxu0 %v2120
    %2133 = vmatpush.msra.mxu0 %v2119
    %2134 = vmatpush.msra.mxu0 %v2118
    %2135 = vmatpush.msra.mxu0 %v2117
    %2136 = vmatpush.msra.mxu0 %v2116
    %2137 = vmatpush.msra.mxu0 %v2115
    %2138 = vmatpush.msra.mxu0 %v2114
    %2139 = vmatpush.msra.mxu0 %v2113
    %2140 = vmatpush.msra.mxu0 %v2112
    %2141 = vmatmul.f32.gmra.mxu0 %v2123
    %v2142 = vpop.f32.mrf.mxu0
    %v2143 = vadd.f32 0.0, %v2142
    %2144 = vdwg.mxu0
    %v2145 = vadd.f32 %v2109, %v2143
    %v2146 = vld [vmem:[%s8] sm:$0x1]
    %v2147 = vadd.f32 %v2145, %v2146
    %v2148 = vmax.f32 %v2147, 0.0
    %2149 = vst [vmem:[#allocation6] sm:$0x1] %v2148
    %v2150 = vld [vmem:[#allocation5 + $0x20] sm:$0x1]
    %v2151 = vld [vmem:[%s7] sm:$0xff]
    %v2152 = vld [vmem:[%s7 + $0x8] sm:$0xff]
    %v2153 = vld [vmem:[%s7 + $0x10] sm:$0xff]
    %v2154 = vld [vmem:[%s7 + $0x18] sm:$0xff]
    %v2155 = vld [vmem:[%s7 + $0x20] sm:$0xff]
    %v2156 = vld [vmem:[%s7 + $0x28] sm:$0xff]
    %v2157 = vld [vmem:[%s7 + $0x30] sm:$0xff]
    %v2158 = vld [vmem:[%s7 + $0x38] sm:$0xff]
    %v2159 = vld [vmem:[%s7 + $0x40] sm:$0xff]
    %v2160 = vld [vmem:[%s7 + $0x48] sm:$0xff]
    %v2161 = vld [vmem:[#allocation5 + $0x24] sm:$0x1]
    %v2162 = vld [vmem:[%s1981] sm:$0xff]
    %v2163 = vld [vmem:[%s1981 + $0x8] sm:$0xff]
    %v2164 = vld [vmem:[%s1981 + $0x10] sm:$0xff]
    %v2165 = vld [vmem:[%s1981 + $0x18] sm:$0xff]
    %v2166 = vld [vmem:[%s1981 + $0x20] sm:$0xff]
    %v2167 = vld [vmem:[%s1981 + $0x28] sm:$0xff]
    %v2168 = vld [vmem:[%s1981 + $0x30] sm:$0xff]
    %v2169 = vld [vmem:[%s1981 + $0x38] sm:$0xff]
    %v2170 = vld [vmem:[%s1981 + $0x40] sm:$0xff]
    %v2171 = vld [vmem:[%s1981 + $0x48] sm:$0xff]
    %v2173 = vsel %vm1960, %v2161, 0
    %2175 = vmatpush.msra.mxu0 0.0
    %2176 = vmatpush.msra.mxu0 0.0
    %2177 = vmatpush.msra.mxu0 0.0
    %2178 = vmatpush.msra.mxu0 0.0
    %2179 = vmatpush.msra.mxu0 0.0
    %2180 = vmatpush.msra.mxu0 0.0
    %2181 = vmatpush.msra.mxu0 %v2171
    %2182 = vmatpush.msra.mxu0 %v2170
    %2183 = vmatpush.msra.mxu0 %v2169
    %2184 = vmatpush.msra.mxu0 %v2168
    %2185 = vmatpush.msra.mxu0 %v2167
    %2186 = vmatpush.msra.mxu0 %v2166
    %2187 = vmatpush.msra.mxu0 %v2165
    %2188 = vmatpush.msra.mxu0 %v2164
    %2189 = vmatpush.msra.mxu0 %v2163
    %2190 = vmatpush.msra.mxu0 %v2162
    %2191 = vmatmul.f32.gmra.mxu0 %v2173
    %v2192 = vpop.f32.mrf.mxu0
    %v2193 = vadd.f32 0.0, %v2192
    %2194 = vdwg.mxu0
    %v2196 = vsel %vm1960, %v2150, 0
    %2198 = vmatpush.msra.mxu0 0.0
    %2199 = vmatpush.msra.mxu0 0.0
    %2200 = vmatpush.msra.mxu0 0.0
    %2201 = vmatpush.msra.mxu0 0.0
    %2202 = vmatpush.msra.mxu0 0.0
    %2203 = vmatpush.msra.mxu0 0.0
    %2204 = vmatpush.msra.mxu0 %v2160
    %2205 = vmatpush.msra.mxu0 %v2159
    %2206 = vmatpush.msra.mxu0 %v2158
    %2207 = vmatpush.msra.mxu0 %v2157
    %2208 = vmatpush.msra.mxu0 %v2156
    %2209 = vmatpush.msra.mxu0 %v2155
    %2210 = vmatpush.msra.mxu0 %v2154
    %2211 = vmatpush.msra.mxu0 %v2153
    %2212 = vmatpush.msra.mxu0 %v2152
    %2213 = vmatpush.msra.mxu0 %v2151
    %2214 = vmatmul.f32.gmra.mxu0 %v2196
    %v2215 = vpop.f32.mrf.mxu0
    %v2216 = vadd.f32 %v2193, %v2215
    %2217 = vdwg.mxu0
    %v2218 = vld [vmem:[#allocation5 + $0x28] sm:$0x1]
    %v2219 = vld [vmem:[%s2039] sm:$0xff]
    %v2220 = vld [vmem:[%s2039 + $0x8] sm:$0xff]
    %v2221 = vld [vmem:[%s2039 + $0x10] sm:$0xff]
    %v2222 = vld [vmem:[%s2039 + $0x18] sm:$0xff]
    %v2223 = vld [vmem:[%s2039 + $0x20] sm:$0xff]
    %v2224 = vld [vmem:[%s2039 + $0x28] sm:$0xff]
    %v2225 = vld [vmem:[%s2039 + $0x30] sm:$0xff]
    %v2226 = vld [vmem:[%s2039 + $0x38] sm:$0xff]
    %v2227 = vld [vmem:[%s2039 + $0x40] sm:$0xff]
    %v2228 = vld [vmem:[%s2039 + $0x48] sm:$0xff]
    %v2230 = vsel %vm1960, %v2218, 0
    %2232 = vmatpush.msra.mxu0 0.0
    %2233 = vmatpush.msra.mxu0 0.0
    %2234 = vmatpush.msra.mxu0 0.0
    %2235 = vmatpush.msra.mxu0 0.0
    %2236 = vmatpush.msra.mxu0 0.0
    %2237 = vmatpush.msra.mxu0 0.0
    %2238 = vmatpush.msra.mxu0 %v2228
    %2239 = vmatpush.msra.mxu0 %v2227
    %2240 = vmatpush.msra.mxu0 %v2226
    %2241 = vmatpush.msra.mxu0 %v2225
    %2242 = vmatpush.msra.mxu0 %v2224
    %2243 = vmatpush.msra.mxu0 %v2223
    %2244 = vmatpush.msra.mxu0 %v2222
    %2245 = vmatpush.msra.mxu0 %v2221
    %2246 = vmatpush.msra.mxu0 %v2220
    %2247 = vmatpush.msra.mxu0 %v2219
    %2248 = vmatmul.f32.gmra.mxu0 %v2230
    %v2249 = vpop.f32.mrf.mxu0
    %v2250 = vadd.f32 0.0, %v2249
    %2251 = vdwg.mxu0
    %v2252 = vadd.f32 %v2216, %v2250
    %v2253 = vld [vmem:[#allocation5 + $0x2c] sm:$0x1]
    %v2254 = vld [vmem:[%s2075] sm:$0xff]
    %v2255 = vld [vmem:[%s2075 + $0x8] sm:$0xff]
    %v2256 = vld [vmem:[%s2075 + $0x10] sm:$0xff]
    %v2257 = vld [vmem:[%s2075 + $0x18] sm:$0xff]
    %v2258 = vld [vmem:[%s2075 + $0x20] sm:$0xff]
    %v2259 = vld [vmem:[%s2075 + $0x28] sm:$0xff]
    %v2260 = vld [vmem:[%s2075 + $0x30] sm:$0xff]
    %v2261 = vld [vmem:[%s2075 + $0x38] sm:$0xff]
    %v2262 = vld [vmem:[%s2075 + $0x40] sm:$0xff]
    %v2263 = vld [vmem:[%s2075 + $0x48] sm:$0xff]
    %v2265 = vsel %vm1960, %v2253, 0
    %2267 = vmatpush.msra.mxu0 0.0
    %2268 = vmatpush.msra.mxu0 0.0
    %2269 = vmatpush.msra.mxu0 0.0
    %2270 = vmatpush.msra.mxu0 0.0
    %2271 = vmatpush.msra.mxu0 0.0
    %2272 = vmatpush.msra.mxu0 0.0
    %2273 = vmatpush.msra.mxu0 %v2263
    %2274 = vmatpush.msra.mxu0 %v2262
    %2275 = vmatpush.msra.mxu0 %v2261
    %2276 = vmatpush.msra.mxu0 %v2260
    %2277 = vmatpush.msra.mxu0 %v2259
    %2278 = vmatpush.msra.mxu0 %v2258
    %2279 = vmatpush.msra.mxu0 %v2257
    %2280 = vmatpush.msra.mxu0 %v2256
    %2281 = vmatpush.msra.mxu0 %v2255
    %2282 = vmatpush.msra.mxu0 %v2254
    %2283 = vmatmul.f32.gmra.mxu0 %v2265
    %v2284 = vpop.f32.mrf.mxu0
    %v2285 = vadd.f32 0.0, %v2284
    %2286 = vdwg.mxu0
    %v2287 = vadd.f32 %v2252, %v2285
    %v2288 = vld [vmem:[#allocation5 + $0x30] sm:$0x1]
    %v2289 = vld [vmem:[%s2111] sm:$0xff]
    %v2290 = vld [vmem:[%s2111 + $0x8] sm:$0xff]
    %v2291 = vld [vmem:[%s2111 + $0x10] sm:$0xff]
    %v2292 = vld [vmem:[%s2111 + $0x18] sm:$0xff]
    %v2293 = vld [vmem:[%s2111 + $0x20] sm:$0xff]
    %v2294 = vld [vmem:[%s2111 + $0x28] sm:$0xff]
    %v2295 = vld [vmem:[%s2111 + $0x30] sm:$0xff]
    %v2296 = vld [vmem:[%s2111 + $0x38] sm:$0xff]
    %v2297 = vld [vmem:[%s2111 + $0x40] sm:$0xff]
    %v2298 = vld [vmem:[%s2111 + $0x48] sm:$0xff]
    %v2300 = vsel %vm1960, %v2288, 0
    %2302 = vmatpush.msra.mxu0 0.0
    %2303 = vmatpush.msra.mxu0 0.0
    %2304 = vmatpush.msra.mxu0 0.0
    %2305 = vmatpush.msra.mxu0 0.0
    %2306 = vmatpush.msra.mxu0 0.0
    %2307 = vmatpush.msra.mxu0 0.0
    %2308 = vmatpush.msra.mxu0 %v2298
    %2309 = vmatpush.msra.mxu0 %v2297
    %2310 = vmatpush.msra.mxu0 %v2296
    %2311 = vmatpush.msra.mxu0 %v2295
    %2312 = vmatpush.msra.mxu0 %v2294
    %2313 = vmatpush.msra.mxu0 %v2293
    %2314 = vmatpush.msra.mxu0 %v2292
    %2315 = vmatpush.msra.mxu0 %v2291
    %2316 = vmatpush.msra.mxu0 %v2290
    %2317 = vmatpush.msra.mxu0 %v2289
    %2318 = vmatmul.f32.gmra.mxu0 %v2300
    %v2319 = vpop.f32.mrf.mxu0
    %v2320 = vadd.f32 0.0, %v2319
    %2321 = vdwg.mxu0
    %v2322 = vadd.f32 %v2287, %v2320
    %v2323 = vld [vmem:[%s8] sm:$0x1]
    %v2324 = vadd.f32 %v2322, %v2323
    %v2325 = vmax.f32 %v2324, 0.0
    %2326 = vst [vmem:[#allocation6 + $0x1] sm:$0x1] %v2325
    %v2327 = vld [vmem:[#allocation6] sm:$0x3]
    %v2328 = vld [vmem:[%s9] sm:$0xff]
    %v2329 = vld [vmem:[%s9 + $0x8] sm:$0xff]
    %v2330 = vld [vmem:[%s9 + $0x10] sm:$0xff]
    %v2331 = vld [vmem:[%s9 + $0x18] sm:$0xff]
    %v2332 = vld [vmem:[%s9 + $0x20] sm:$0xff]
    %v2333 = vld [vmem:[%s9 + $0x28] sm:$0xff]
    %v2334 = vld [vmem:[%s9 + $0x30] sm:$0xff]
    %v2335 = vld [vmem:[%s9 + $0x38] sm:$0xff]
    %v2336 = vld [vmem:[%s9 + $0x40] sm:$0xff]
    %v2337 = vld [vmem:[%s9 + $0x48] sm:$0xff]
    %v2338 = vld [vmem:[%s9 + $0x50] sm:$0xff]
    %v2339 = vld [vmem:[%s9 + $0x58] sm:$0xff]
    %v2340 = vld [vmem:[%s9 + $0x60] sm:$0xff]
    %v2341 = vld [vmem:[%s9 + $0x68] sm:$0xff]
    %v2342 = vld [vmem:[%s9 + $0x70] sm:$0xff]
    %v2343 = vld [vmem:[%s9 + $0x78] sm:$0xff]
    %v2344 = vld [vmem:[%s10] sm:$0x1]
    %v2346 = vperm.slane %v2344, 0
    %2348 = vmatpush.msra.mxu0 %v2343
    %2349 = vmatpush.msra.mxu0 %v2342
    %2350 = vmatpush.msra.mxu0 %v2341
    %2351 = vmatpush.msra.mxu0 %v2340
    %2352 = vmatpush.msra.mxu0 %v2339
    %2353 = vmatpush.msra.mxu0 %v2338
    %2354 = vmatpush.msra.mxu0 %v2337
    %2355 = vmatpush.msra.mxu0 %v2336
    %2356 = vmatpush.msra.mxu0 %v2335
    %2357 = vmatpush.msra.mxu0 %v2334
    %2358 = vmatpush.msra.mxu0 %v2333
    %2359 = vmatpush.msra.mxu0 %v2332
    %2360 = vmatpush.msra.mxu0 %v2331
    %2361 = vmatpush.msra.mxu0 %v2330
    %2362 = vmatpush.msra.mxu0 %v2329
    %2363 = vmatpush.msra.mxu0 %v2328
    %2364 = vmatmul.f32.gmra.mxu0 %v2327
    %v2365 = vpop.f32.mrf.mxu0
    %v2366 = vadd.f32 %v2346, %v2365
    %2367 = vdwg.mxu0
    %v2368 = vmax.f32 %v2366, 0.0
    %v2369 = vld [vmem:[%s11] sm:$0xff]
    %v2370 = vld [vmem:[%s11 + $0x8] sm:$0xff]
    %v2371 = vld [vmem:[%s11 + $0x10] sm:$0xff]
    %v2372 = vld [vmem:[%s11 + $0x18] sm:$0xff]
    %v2373 = vld [vmem:[%s11 + $0x20] sm:$0xff]
    %v2374 = vld [vmem:[%s11 + $0x28] sm:$0xff]
    %v2375 = vld [vmem:[%s11 + $0x30] sm:$0xff]
    %v2376 = vld [vmem:[%s11 + $0x38] sm:$0xff]
    %v2377 = vld [vmem:[%s11 + $0x40] sm:$0xff]
    %v2378 = vld [vmem:[%s11 + $0x48] sm:$0xff]
    %v2379 = vld [vmem:[%s11 + $0x50] sm:$0xff]
    %v2380 = vld [vmem:[%s11 + $0x58] sm:$0xff]
    %v2381 = vld [vmem:[%s11 + $0x60] sm:$0xff]
    %v2382 = vld [vmem:[%s11 + $0x68] sm:$0xff]
    %v2383 = vld [vmem:[%s11 + $0x70] sm:$0xff]
    %v2384 = vld [vmem:[%s11 + $0x78] sm:$0xff]
    %v2385 = vld [vmem:[%s12] sm:$0x1]
    %v2387 = vperm.slane %v2385, 0
    %2389 = vmatpush.msra.mxu0 %v2384
    %2390 = vmatpush.msra.mxu0 %v2383
    %2391 = vmatpush.msra.mxu0 %v2382
    %2392 = vmatpush.msra.mxu0 %v2381
    %2393 = vmatpush.msra.mxu0 %v2380
    %2394 = vmatpush.msra.mxu0 %v2379
    %2395 = vmatpush.msra.mxu0 %v2378
    %2396 = vmatpush.msra.mxu0 %v2377
    %2397 = vmatpush.msra.mxu0 %v2376
    %2398 = vmatpush.msra.mxu0 %v2375
    %2399 = vmatpush.msra.mxu0 %v2374
    %2400 = vmatpush.msra.mxu0 %v2373
    %2401 = vmatpush.msra.mxu0 %v2372
    %2402 = vmatpush.msra.mxu0 %v2371
    %2403 = vmatpush.msra.mxu0 %v2370
    %2404 = vmatpush.msra.mxu0 %v2369
    %2405 = vmatmul.f32.gmra.mxu0 %v2368
    %v2406 = vpop.f32.mrf.mxu0
    %v2407 = vadd.f32 %v2387, %v2406
    %2408 = vdwg.mxu0
    %2409 = vst [vmem:[#allocation7] sm:$0x3] %v2407
    // Predicated region
    $region54: #{lenet_forward.1} parent=1 // pred_check
      _
    $region55: #{lenet_forward.1} parent=1 // pred_check_branch
      %2411 = sbr.rel (0) target = $region57
    $region56: #{lenet_forward.1} parent=1 // pred_region
      %2413 = vsyncadd [#allocation8], 0
      %s2415 = sshll.u32 [#allocation7], 4
      %s2416 = int_to_ptr.vmem [resolvable:$true] %s2415
      %s2417 = sshll.u32 %s13, 4
      %s2418 = int_to_ptr.hbm [resolvable:$true] %s2417
      %2420 = dma.vmem_to_hbm [thread:$0]  %s2416, 32, %s2418, [#allocation8]
    $region57: #{lenet_forward.1} parent=1 // pred_fallthru
      _
    // Predicated region
    $region58: #{lenet_forward.1} parent=1 // pred_check
      _
    $region59: #{lenet_forward.1} parent=1 // pred_check_branch
      %2422 = sbr.rel (0) target = $region61
    $region60: #{lenet_forward.1} parent=1 // pred_region
      %2424 = dma.done [#allocation8], 32
    $region61: #{lenet_forward.1} parent=1 // pred_fallthru
      _
    %2425 = vsyncpa [#allocation8], 1

</llo_original>
